<compile_context>
chip_gen: v7x
topology: tpu7x:2x2x1
jax: 0.10.0
libtpu: 0.0.40
codegen_flags: <defaults>
</compile_context>

<pallas_src>
import functools

import jax
import jax.numpy as jnp
from jax.experimental import pallas as pl
from jax.experimental.pallas import tpu as pltpu


def _round_up(n, m):
    return ((n + m - 1) // m) * m


# --------------------------- Fused LSTM + decoder kernel --------------------------- #
def _lstm_decoder_kernel(x_ref, wih_ref, whh_ref, bias_ref, wd_ref, bdec_ref,
                         out_ref, hs_ref, *, B, T, H):
    """Fused single-layer LSTM (zero-init h/c) + batch-first flatten + Linear decoder.

    x_ref    : (B*T, E)  f32   b-major flatten of the (B, T, E) input (free reshape)
    wih_ref  : (E, Fp)   bf16  W_ih^T, gates [i,f,g,o] packed densely at stride H
    whh_ref  : (H, Fp)   bf16  W_hh^T, same dense gate layout, lanes >= 4H are zero
    bias_ref : (1, Fp)   f32   b_ih + b_hh, zero in padded lanes
    wd_ref   : (T*H, Cp) bf16  W_dec^T (row index = t*H + j), classes zero-padded to Cp
    bdec_ref : (1, Cp)   f32   decoder bias, zero-padded
    out_ref  : (B, Cp)   f32   decoder output (padded classes), single lane-dense store
    hs_ref   : (B, T*H)  f32   VMEM scratch holding every h_t for the deferred decoder
    """
    Fp = wih_ref.shape[1]

    # (1) One bf16 MXU matmul for ALL input projections, bias folded in (f32 accumulate).
    zx = jnp.dot(x_ref[...].astype(jnp.bfloat16), wih_ref[...],
                 preferred_element_type=jnp.float32)                    # (B*T, Fp)
    zx = zx + jnp.broadcast_to(bias_ref[...], zx.shape)                  # hoisted bias add
    zx = zx.reshape(B, T, Fp)                                            # tile-aligned view

    whh = whh_ref[...]                                                   # (H, Fp) bf16

    h = jnp.zeros((B, H), jnp.float32)
    c = jnp.zeros((B, H), jnp.float32)

    # (2) T is small & static: fully unroll. Only the tiny (B,H)@(H,Fp) recurrent dot and
    #     the gate elementwise math sit on the serial h -> h dependency chain.
    for t in range(T):
        z = zx[:, t, :] + jnp.dot(h.astype(jnp.bfloat16), whh,
                                  preferred_element_type=jnp.float32)    # (B, Fp)

        # Two EUP dispatches per step; gate picks are lane-offset selects (XLU slot).
        zs = jax.nn.sigmoid(z)
        zt = jnp.tanh(z)
        i_g = zs[:, 0 * H:1 * H]
        f_g = zs[:, 1 * H:2 * H]
        g_g = zt[:, 2 * H:3 * H]
        o_g = zs[:, 3 * H:4 * H]

        # (3) Elementwise math in f32 (v5e has no bf16 VPU/EUP path).
        c = f_g * c + i_g * g_g
        h = o_g * jnp.tanh(c)

        # (4) Deferred decoder: stash h_t, no per-step decoder matmul / f32 accumulate-add.
        hs_ref[:, t * H:(t + 1) * H] = h

    # (5) One long-K decoder matmul after the loop (MXU accumulates internally).
    flat = hs_ref[...].astype(jnp.bfloat16)                               # (B, T*H)
    dec = jnp.dot(flat, wd_ref[...], preferred_element_type=jnp.float32)  # (B, Cp)
    out_ref[...] = (dec + jnp.broadcast_to(bdec_ref[...], dec.shape)).astype(out_ref.dtype)


# ----------------------------------- Forward wrapper ------------------------------- #
@functools.partial(jax.jit, static_argnames=("numclass",))
def rnn_model_forward(inputs_bte, kparams, *, numclass):
    """inputs_bte: (B, T, E) batch-first, matching PyTorch's forward."""
    B, T, E = inputs_bte.shape
    wd_p = kparams["wd_p"]
    H = kparams["whh_p"].shape[0]
    if T * H != wd_p.shape[0]:
        raise ValueError("seq_len must equal hidden (decoder.in_features = hidden*hidden)")
    Cp = wd_p.shape[1]

    # Free b-major flatten (no transpose, no extra HBM round trip).
    x_flat = inputs_bte.reshape(B * T, E)

    kernel = functools.partial(_lstm_decoder_kernel, B=B, T=T, H=H)
    vmem = pl.BlockSpec(memory_space=pltpu.MemorySpace.VMEM)
    # TODO(synk): if B grows, add a leading grid axis over batch tiles with
    # dimension_semantics=("parallel",) so v7x's two TensorCores are both used.
    out_padded = pl.pallas_call(
        kernel,
        out_shape=jax.ShapeDtypeStruct((B, Cp), jnp.float32),
        in_specs=[vmem] * 6,
        out_specs=vmem,
        scratch_shapes=[pltpu.VMEM((B, T * H), jnp.float32)],
    )(x_flat, kparams["wih_p"], kparams["whh_p"], kparams["bias_p"], wd_p,
      kparams["bdec_p"])

    # TODO(synk): nn.Dropout(0.8) is identity in eval mode; training-mode masking omitted.
    return out_padded[:, :numclass]


# ------------------------------------- Parameters ---------------------------------- #
def init_params(key, *, embed, hidden, numclass, seq_len):
    """PyTorch-style init, returned both packed-for-kernel and raw (for the reference)."""
    E, H, C, T = embed, hidden, numclass, seq_len
    assert T == H, "decoder.in_features = hidden*hidden requires seq_len == hidden"

    k1, k2, k3, k4, k5 = jax.random.split(key, 5)
    bound = 1.0 / (H ** 0.5)
    w_ih = jax.random.uniform(k1, (4 * H, E), jnp.float32, -bound, bound)
    w_hh = jax.random.uniform(k2, (4 * H, H), jnp.float32, -bound, bound)
    b_ih = jax.random.uniform(k3, (4 * H,), jnp.float32, -bound, bound)
    b_hh = jax.random.uniform(k4, (4 * H,), jnp.float32, -bound, bound)
    # decoder: Linear(H*H -> C), weight uniform(-1e-4, 1e-4), bias 0 (per _init_weights)
    w_dec = jax.random.uniform(k5, (C, H * H), jnp.float32, -1e-4, 1e-4)
    b_dec = jnp.zeros((C,), jnp.float32)

    # ---- pack into dense, lane-padded, pre-transposed, bf16 kernel layout ----
    Fp = _round_up(4 * H, 128)          # dense gate packing: lanes [g*H, (g+1)*H)
    Cp = _round_up(C, 128)
    b_comb = b_ih + b_hh

    # PyTorch row order is already [i, f, g, o] at stride H -> transpose maps straight in.
    wih_p = jnp.zeros((E, Fp), jnp.float32).at[:, :4 * H].set(w_ih.T).astype(jnp.bfloat16)
    whh_p = jnp.zeros((H, Fp), jnp.float32).at[:, :4 * H].set(w_hh.T).astype(jnp.bfloat16)
    bias_p = jnp.zeros((1, Fp), jnp.float32).at[0, :4 * H].set(b_comb)

    # wd_p[t*H + j, c] = W_dec[c, t*H + j]  (batch-first flatten order of PyTorch reshape)
    wd_p = jnp.zeros((T * H, Cp), jnp.float32).at[:, :C].set(w_dec.T).astype(jnp.bfloat16)
    bdec_p = jnp.zeros((1, Cp), jnp.float32).at[0, :C].set(b_dec)

    kernel_params = dict(wih_p=wih_p, whh_p=whh_p, bias_p=bias_p, wd_p=wd_p, bdec_p=bdec_p)
    raw_params = dict(w_ih=w_ih, w_hh=w_hh, b_ih=b_ih, b_hh=b_hh, w_dec=w_dec, b_dec=b_dec)
    return kernel_params, raw_params


# --------------------------------- Pure-JAX reference ------------------------------- #
def reference_forward(inputs, raw):
    w_ih, w_hh, b_ih, b_hh = raw["w_ih"], raw["w_hh"], raw["b_ih"], raw["b_hh"]
    w_dec, b_dec = raw["w_dec"], raw["b_dec"]
    B, T, _ = inputs.shape
    H = w_hh.shape[1]
    hi = jnp.zeros((B, H), jnp.float32)
    ci = jnp.zeros((B, H), jnp.float32)
    hs = []
    hi_prec = jax.lax.Precision.HIGHEST
    for t in range(T):
        z = (jnp.dot(inputs[:, t, :], w_ih.T, precision=hi_prec)
             + jnp.dot(hi, w_hh.T, precision=hi_prec) + b_ih + b_hh)
        i_g = jax.nn.sigmoid(z[:, 0 * H:1 * H])
        f_g = jax.nn.sigmoid(z[:, 1 * H:2 * H])
        g_g = jnp.tanh(z[:, 2 * H:3 * H])
        o_g = jax.nn.sigmoid(z[:, 3 * H:4 * H])
        ci = f_g * ci + i_g * g_g
        hi = o_g * jnp.tanh(ci)
        hs.append(hi)
    flat = jnp.stack(hs, axis=1).reshape(B, -1)                          # (B, T*H)
    return jnp.dot(flat, w_dec.T, precision=hi_prec) + b_dec


# --------------------------------------- Main --------------------------------------- #
if __name__ == "__main__":
    # Small shapes consistent with the module: decoder.in_features = hidden*hidden
    # forces seq_len == hidden.
    B, E, H, C = 2, 8, 16, 10
    T = H

    key = jax.random.PRNGKey(0)
    k_in, k_p = jax.random.split(key)
    inputs = jax.random.normal(k_in, (B, T, E), jnp.float32)
    kparams, raw = init_params(k_p, embed=E, hidden=H, numclass=C, seq_len=T)

    out = rnn_model_forward(inputs, kparams, numclass=C)
    out = jax.block_until_ready(out)
    assert out.shape == (B, C), out.shape

    ref = reference_forward(inputs, raw)
    max_err = float(jnp.max(jnp.abs(out - ref)))
    assert max_err < 1e-3, f"kernel/reference mismatch, max abs err = {max_err}"
    print("KERNEL_OK")
</pallas_src>

<mosaic_0001>
module attributes {stable_mosaic.version = 11 : i64} {
  func.func @_lstm_decoder_kernel(%arg0: memref<32x8xf32, #tpu.memory_space<vmem>>, %arg1: memref<8x128xbf16, #tpu.memory_space<vmem>>, %arg2: memref<16x128xbf16, #tpu.memory_space<vmem>>, %arg3: memref<1x128xf32, #tpu.memory_space<vmem>>, %arg4: memref<256x128xbf16, #tpu.memory_space<vmem>>, %arg5: memref<1x128xf32, #tpu.memory_space<vmem>>, %arg6: memref<2x128xf32, #tpu.memory_space<vmem>>, %arg7: memref<2x256xf32, #tpu.memory_space<vmem>>) attributes {dimension_semantics = [], scalar_prefetch = 0 : i64, scratch_operands = 1 : i64, tpu.core_type = #tpu.core_type<tc>} {
    %c0 = arith.constant 0 : index
    %c0_0 = arith.constant 0 : index
    %0 = vector.load %arg0[%c0, %c0_0] : memref<32x8xf32, #tpu.memory_space<vmem>>, vector<32x8xf32>
    %1 = arith.truncf %0 : vector<32x8xf32> to vector<32x8xbf16>
    %c0_1 = arith.constant 0 : index
    %c0_2 = arith.constant 0 : index
    %2 = vector.load %arg1[%c0_1, %c0_2] : memref<8x128xbf16, #tpu.memory_space<vmem>>, vector<8x128xbf16>
    %cst = arith.constant dense<0.000000e+00> : vector<32x128xf32>
    %3 = tpu.matmul %1, %2, %cst {dimension_numbers = #tpu.dot_dimension_numbers<[1], [0], [0], [1], [0, 0, 1, 1], [], []>} : vector<32x8xbf16>, vector<8x128xbf16>, vector<32x128xf32> -> vector<32x128xf32>
    %c0_3 = arith.constant 0 : index
    %c0_4 = arith.constant 0 : index
    %4 = vector.load %arg3[%c0_3, %c0_4] : memref<1x128xf32, #tpu.memory_space<vmem>>, vector<1x128xf32>
    %5 = vector.shape_cast %4 : vector<1x128xf32> to vector<1x128xf32>
    %6 = vector.broadcast %5 : vector<1x128xf32> to vector<32x128xf32>
    %7 = arith.addf %3, %6 : vector<32x128xf32>
    %8 = vector.shape_cast %7 : vector<32x128xf32> to vector<2x16x128xf32>
    %c0_5 = arith.constant 0 : index
    %c0_6 = arith.constant 0 : index
    %9 = vector.load %arg2[%c0_5, %c0_6] : memref<16x128xbf16, #tpu.memory_space<vmem>>, vector<16x128xbf16>
    %cst_7 = arith.constant 0.000000e+00 : f32
    %10 = vector.broadcast %cst_7 : f32 to vector<2x16xf32>
    %cst_8 = arith.constant 0.000000e+00 : f32
    %11 = vector.broadcast %cst_8 : f32 to vector<2x16xf32>
    %12 = vector.extract_strided_slice %8 {offsets = [0, 0, 0], sizes = [2, 1, 128], strides = [1, 1, 1]} : vector<2x16x128xf32> to vector<2x1x128xf32>
    %13 = vector.shape_cast %12 : vector<2x1x128xf32> to vector<2x128xf32>
    %14 = arith.truncf %10 : vector<2x16xf32> to vector<2x16xbf16>
    %cst_9 = arith.constant dense<0.000000e+00> : vector<2x128xf32>
    %15 = tpu.matmul %14, %9, %cst_9 {dimension_numbers = #tpu.dot_dimension_numbers<[1], [0], [0], [1], [0, 0, 1, 1], [], []>} : vector<2x16xbf16>, vector<16x128xbf16>, vector<2x128xf32> -> vector<2x128xf32>
    %16 = arith.addf %13, %15 : vector<2x128xf32>
    %17 = arith.negf %16 : vector<2x128xf32>
    %18 = math.exp %17 : vector<2x128xf32>
    %cst_10 = arith.constant 1.000000e+00 : f32
    %19 = vector.broadcast %cst_10 : f32 to vector<2x128xf32>
    %20 = arith.addf %19, %18 : vector<2x128xf32>
    %21 = arith.divf %19, %20 : vector<2x128xf32>
    %22 = math.tanh %16 : vector<2x128xf32>
    %23 = vector.extract_strided_slice %21 {offsets = [0, 0], sizes = [2, 16], strides = [1, 1]} : vector<2x128xf32> to vector<2x16xf32>
    %24 = vector.extract_strided_slice %21 {offsets = [0, 16], sizes = [2, 16], strides = [1, 1]} : vector<2x128xf32> to vector<2x16xf32>
    %25 = vector.extract_strided_slice %22 {offsets = [0, 32], sizes = [2, 16], strides = [1, 1]} : vector<2x128xf32> to vector<2x16xf32>
    %26 = vector.extract_strided_slice %21 {offsets = [0, 48], sizes = [2, 16], strides = [1, 1]} : vector<2x128xf32> to vector<2x16xf32>
    %27 = arith.mulf %24, %11 : vector<2x16xf32>
    %28 = arith.mulf %23, %25 : vector<2x16xf32>
    %29 = arith.addf %27, %28 : vector<2x16xf32>
    %30 = math.tanh %29 : vector<2x16xf32>
    %31 = arith.mulf %26, %30 : vector<2x16xf32>
    %c0_11 = arith.constant 0 : index
    %c0_12 = arith.constant 0 : index
    %32 = vector.load %arg7[%c0_11, %c0_12] : memref<2x256xf32, #tpu.memory_space<vmem>>, vector<2x16xf32>
    tpu.vector_store %arg7[%c0_11, %c0_12], %31 {strides = array<i32>} : memref<2x256xf32, #tpu.memory_space<vmem>>, vector<2x16xf32>,
    %33 = vector.extract_strided_slice %8 {offsets = [0, 1, 0], sizes = [2, 1, 128], strides = [1, 1, 1]} : vector<2x16x128xf32> to vector<2x1x128xf32>
    %34 = vector.shape_cast %33 : vector<2x1x128xf32> to vector<2x128xf32>
    %35 = arith.truncf %31 : vector<2x16xf32> to vector<2x16xbf16>
    %cst_13 = arith.constant dense<0.000000e+00> : vector<2x128xf32>
    %36 = tpu.matmul %35, %9, %cst_13 {dimension_numbers = #tpu.dot_dimension_numbers<[1], [0], [0], [1], [0, 0, 1, 1], [], []>} : vector<2x16xbf16>, vector<16x128xbf16>, vector<2x128xf32> -> vector<2x128xf32>
    %37 = arith.addf %34, %36 : vector<2x128xf32>
    %38 = arith.negf %37 : vector<2x128xf32>
    %39 = math.exp %38 : vector<2x128xf32>
    %cst_14 = arith.constant 1.000000e+00 : f32
    %40 = vector.broadcast %cst_14 : f32 to vector<2x128xf32>
    %41 = arith.addf %40, %39 : vector<2x128xf32>
    %42 = arith.divf %40, %41 : vector<2x128xf32>
    %43 = math.tanh %37 : vector<2x128xf32>
    %44 = vector.extract_strided_slice %42 {offsets = [0, 0], sizes = [2, 16], strides = [1, 1]} : vector<2x128xf32> to vector<2x16xf32>
    %45 = vector.extract_strided_slice %42 {offsets = [0, 16], sizes = [2, 16], strides = [1, 1]} : vector<2x128xf32> to vector<2x16xf32>
    %46 = vector.extract_strided_slice %43 {offsets = [0, 32], sizes = [2, 16], strides = [1, 1]} : vector<2x128xf32> to vector<2x16xf32>
    %47 = vector.extract_strided_slice %42 {offsets = [0, 48], sizes = [2, 16], strides = [1, 1]} : vector<2x128xf32> to vector<2x16xf32>
    %48 = arith.mulf %45, %29 : vector<2x16xf32>
    %49 = arith.mulf %44, %46 : vector<2x16xf32>
    %50 = arith.addf %48, %49 : vector<2x16xf32>
    %51 = math.tanh %50 : vector<2x16xf32>
    %52 = arith.mulf %47, %51 : vector<2x16xf32>
    %c0_15 = arith.constant 0 : index
    %c16 = arith.constant 16 : index
    %53 = vector.load %arg7[%c0_15, %c16] : memref<2x256xf32, #tpu.memory_space<vmem>>, vector<2x16xf32>
    tpu.vector_store %arg7[%c0_15, %c16], %52 {strides = array<i32>} : memref<2x256xf32, #tpu.memory_space<vmem>>, vector<2x16xf32>,
    %54 = vector.extract_strided_slice %8 {offsets = [0, 2, 0], sizes = [2, 1, 128], strides = [1, 1, 1]} : vector<2x16x128xf32> to vector<2x1x128xf32>
    %55 = vector.shape_cast %54 : vector<2x1x128xf32> to vector<2x128xf32>
    %56 = arith.truncf %52 : vector<2x16xf32> to vector<2x16xbf16>
    %cst_16 = arith.constant dense<0.000000e+00> : vector<2x128xf32>
    %57 = tpu.matmul %56, %9, %cst_16 {dimension_numbers = #tpu.dot_dimension_numbers<[1], [0], [0], [1], [0, 0, 1, 1], [], []>} : vector<2x16xbf16>, vector<16x128xbf16>, vector<2x128xf32> -> vector<2x128xf32>
    %58 = arith.addf %55, %57 : vector<2x128xf32>
    %59 = arith.negf %58 : vector<2x128xf32>
    %60 = math.exp %59 : vector<2x128xf32>
    %cst_17 = arith.constant 1.000000e+00 : f32
    %61 = vector.broadcast %cst_17 : f32 to vector<2x128xf32>
    %62 = arith.addf %61, %60 : vector<2x128xf32>
    %63 = arith.divf %61, %62 : vector<2x128xf32>
    %64 = math.tanh %58 : vector<2x128xf32>
    %65 = vector.extract_strided_slice %63 {offsets = [0, 0], sizes = [2, 16], strides = [1, 1]} : vector<2x128xf32> to vector<2x16xf32>
    %66 = vector.extract_strided_slice %63 {offsets = [0, 16], sizes = [2, 16], strides = [1, 1]} : vector<2x128xf32> to vector<2x16xf32>
    %67 = vector.extract_strided_slice %64 {offsets = [0, 32], sizes = [2, 16], strides = [1, 1]} : vector<2x128xf32> to vector<2x16xf32>
    %68 = vector.extract_strided_slice %63 {offsets = [0, 48], sizes = [2, 16], strides = [1, 1]} : vector<2x128xf32> to vector<2x16xf32>
    %69 = arith.mulf %66, %50 : vector<2x16xf32>
    %70 = arith.mulf %65, %67 : vector<2x16xf32>
    %71 = arith.addf %69, %70 : vector<2x16xf32>
    %72 = math.tanh %71 : vector<2x16xf32>
    %73 = arith.mulf %68, %72 : vector<2x16xf32>
    %c0_18 = arith.constant 0 : index
    %c32 = arith.constant 32 : index
    %74 = vector.load %arg7[%c0_18, %c32] : memref<2x256xf32, #tpu.memory_space<vmem>>, vector<2x16xf32>
    tpu.vector_store %arg7[%c0_18, %c32], %73 {strides = array<i32>} : memref<2x256xf32, #tpu.memory_space<vmem>>, vector<2x16xf32>,
    %75 = vector.extract_strided_slice %8 {offsets = [0, 3, 0], sizes = [2, 1, 128], strides = [1, 1, 1]} : vector<2x16x128xf32> to vector<2x1x128xf32>
    %76 = vector.shape_cast %75 : vector<2x1x128xf32> to vector<2x128xf32>
    %77 = arith.truncf %73 : vector<2x16xf32> to vector<2x16xbf16>
    %cst_19 = arith.constant dense<0.000000e+00> : vector<2x128xf32>
    %78 = tpu.matmul %77, %9, %cst_19 {dimension_numbers = #tpu.dot_dimension_numbers<[1], [0], [0], [1], [0, 0, 1, 1], [], []>} : vector<2x16xbf16>, vector<16x128xbf16>, vector<2x128xf32> -> vector<2x128xf32>
    %79 = arith.addf %76, %78 : vector<2x128xf32>
    %80 = arith.negf %79 : vector<2x128xf32>
    %81 = math.exp %80 : vector<2x128xf32>
    %cst_20 = arith.constant 1.000000e+00 : f32
    %82 = vector.broadcast %cst_20 : f32 to vector<2x128xf32>
    %83 = arith.addf %82, %81 : vector<2x128xf32>
    %84 = arith.divf %82, %83 : vector<2x128xf32>
    %85 = math.tanh %79 : vector<2x128xf32>
    %86 = vector.extract_strided_slice %84 {offsets = [0, 0], sizes = [2, 16], strides = [1, 1]} : vector<2x128xf32> to vector<2x16xf32>
    %87 = vector.extract_strided_slice %84 {offsets = [0, 16], sizes = [2, 16], strides = [1, 1]} : vector<2x128xf32> to vector<2x16xf32>
    %88 = vector.extract_strided_slice %85 {offsets = [0, 32], sizes = [2, 16], strides = [1, 1]} : vector<2x128xf32> to vector<2x16xf32>
    %89 = vector.extract_strided_slice %84 {offsets = [0, 48], sizes = [2, 16], strides = [1, 1]} : vector<2x128xf32> to vector<2x16xf32>
    %90 = arith.mulf %87, %71 : vector<2x16xf32>
    %91 = arith.mulf %86, %88 : vector<2x16xf32>
    %92 = arith.addf %90, %91 : vector<2x16xf32>
    %93 = math.tanh %92 : vector<2x16xf32>
    %94 = arith.mulf %89, %93 : vector<2x16xf32>
    %c0_21 = arith.constant 0 : index
    %c48 = arith.constant 48 : index
    %95 = vector.load %arg7[%c0_21, %c48] : memref<2x256xf32, #tpu.memory_space<vmem>>, vector<2x16xf32>
    tpu.vector_store %arg7[%c0_21, %c48], %94 {strides = array<i32>} : memref<2x256xf32, #tpu.memory_space<vmem>>, vector<2x16xf32>,
    %96 = vector.extract_strided_slice %8 {offsets = [0, 4, 0], sizes = [2, 1, 128], strides = [1, 1, 1]} : vector<2x16x128xf32> to vector<2x1x128xf32>
    %97 = vector.shape_cast %96 : vector<2x1x128xf32> to vector<2x128xf32>
    %98 = arith.truncf %94 : vector<2x16xf32> to vector<2x16xbf16>
    %cst_22 = arith.constant dense<0.000000e+00> : vector<2x128xf32>
    %99 = tpu.matmul %98, %9, %cst_22 {dimension_numbers = #tpu.dot_dimension_numbers<[1], [0], [0], [1], [0, 0, 1, 1], [], []>} : vector<2x16xbf16>, vector<16x128xbf16>, vector<2x128xf32> -> vector<2x128xf32>
    %100 = arith.addf %97, %99 : vector<2x128xf32>
    %101 = arith.negf %100 : vector<2x128xf32>
    %102 = math.exp %101 : vector<2x128xf32>
    %cst_23 = arith.constant 1.000000e+00 : f32
    %103 = vector.broadcast %cst_23 : f32 to vector<2x128xf32>
    %104 = arith.addf %103, %102 : vector<2x128xf32>
    %105 = arith.divf %103, %104 : vector<2x128xf32>
    %106 = math.tanh %100 : vector<2x128xf32>
    %107 = vector.extract_strided_slice %105 {offsets = [0, 0], sizes = [2, 16], strides = [1, 1]} : vector<2x128xf32> to vector<2x16xf32>
    %108 = vector.extract_strided_slice %105 {offsets = [0, 16], sizes = [2, 16], strides = [1, 1]} : vector<2x128xf32> to vector<2x16xf32>
    %109 = vector.extract_strided_slice %106 {offsets = [0, 32], sizes = [2, 16], strides = [1, 1]} : vector<2x128xf32> to vector<2x16xf32>
    %110 = vector.extract_strided_slice %105 {offsets = [0, 48], sizes = [2, 16], strides = [1, 1]} : vector<2x128xf32> to vector<2x16xf32>
    %111 = arith.mulf %108, %92 : vector<2x16xf32>
    %112 = arith.mulf %107, %109 : vector<2x16xf32>
    %113 = arith.addf %111, %112 : vector<2x16xf32>
    %114 = math.tanh %113 : vector<2x16xf32>
    %115 = arith.mulf %110, %114 : vector<2x16xf32>
    %c0_24 = arith.constant 0 : index
    %c64 = arith.constant 64 : index
    %116 = vector.load %arg7[%c0_24, %c64] : memref<2x256xf32, #tpu.memory_space<vmem>>, vector<2x16xf32>
    tpu.vector_store %arg7[%c0_24, %c64], %115 {strides = array<i32>} : memref<2x256xf32, #tpu.memory_space<vmem>>, vector<2x16xf32>,
    %117 = vector.extract_strided_slice %8 {offsets = [0, 5, 0], sizes = [2, 1, 128], strides = [1, 1, 1]} : vector<2x16x128xf32> to vector<2x1x128xf32>
    %118 = vector.shape_cast %117 : vector<2x1x128xf32> to vector<2x128xf32>
    %119 = arith.truncf %115 : vector<2x16xf32> to vector<2x16xbf16>
    %cst_25 = arith.constant dense<0.000000e+00> : vector<2x128xf32>
    %120 = tpu.matmul %119, %9, %cst_25 {dimension_numbers = #tpu.dot_dimension_numbers<[1], [0], [0], [1], [0, 0, 1, 1], [], []>} : vector<2x16xbf16>, vector<16x128xbf16>, vector<2x128xf32> -> vector<2x128xf32>
    %121 = arith.addf %118, %120 : vector<2x128xf32>
    %122 = arith.negf %121 : vector<2x128xf32>
    %123 = math.exp %122 : vector<2x128xf32>
    %cst_26 = arith.constant 1.000000e+00 : f32
    %124 = vector.broadcast %cst_26 : f32 to vector<2x128xf32>
    %125 = arith.addf %124, %123 : vector<2x128xf32>
    %126 = arith.divf %124, %125 : vector<2x128xf32>
    %127 = math.tanh %121 : vector<2x128xf32>
    %128 = vector.extract_strided_slice %126 {offsets = [0, 0], sizes = [2, 16], strides = [1, 1]} : vector<2x128xf32> to vector<2x16xf32>
    %129 = vector.extract_strided_slice %126 {offsets = [0, 16], sizes = [2, 16], strides = [1, 1]} : vector<2x128xf32> to vector<2x16xf32>
    %130 = vector.extract_strided_slice %127 {offsets = [0, 32], sizes = [2, 16], strides = [1, 1]} : vector<2x128xf32> to vector<2x16xf32>
    %131 = vector.extract_strided_slice %126 {offsets = [0, 48], sizes = [2, 16], strides = [1, 1]} : vector<2x128xf32> to vector<2x16xf32>
    %132 = arith.mulf %129, %113 : vector<2x16xf32>
    %133 = arith.mulf %128, %130 : vector<2x16xf32>
    %134 = arith.addf %132, %133 : vector<2x16xf32>
    %135 = math.tanh %134 : vector<2x16xf32>
    %136 = arith.mulf %131, %135 : vector<2x16xf32>
    %c0_27 = arith.constant 0 : index
    %c80 = arith.constant 80 : index
    %137 = vector.load %arg7[%c0_27, %c80] : memref<2x256xf32, #tpu.memory_space<vmem>>, vector<2x16xf32>
    tpu.vector_store %arg7[%c0_27, %c80], %136 {strides = array<i32>} : memref<2x256xf32, #tpu.memory_space<vmem>>, vector<2x16xf32>,
    %138 = vector.extract_strided_slice %8 {offsets = [0, 6, 0], sizes = [2, 1, 128], strides = [1, 1, 1]} : vector<2x16x128xf32> to vector<2x1x128xf32>
    %139 = vector.shape_cast %138 : vector<2x1x128xf32> to vector<2x128xf32>
    %140 = arith.truncf %136 : vector<2x16xf32> to vector<2x16xbf16>
    %cst_28 = arith.constant dense<0.000000e+00> : vector<2x128xf32>
    %141 = tpu.matmul %140, %9, %cst_28 {dimension_numbers = #tpu.dot_dimension_numbers<[1], [0], [0], [1], [0, 0, 1, 1], [], []>} : vector<2x16xbf16>, vector<16x128xbf16>, vector<2x128xf32> -> vector<2x128xf32>
    %142 = arith.addf %139, %141 : vector<2x128xf32>
    %143 = arith.negf %142 : vector<2x128xf32>
    %144 = math.exp %143 : vector<2x128xf32>
    %cst_29 = arith.constant 1.000000e+00 : f32
    %145 = vector.broadcast %cst_29 : f32 to vector<2x128xf32>
    %146 = arith.addf %145, %144 : vector<2x128xf32>
    %147 = arith.divf %145, %146 : vector<2x128xf32>
    %148 = math.tanh %142 : vector<2x128xf32>
    %149 = vector.extract_strided_slice %147 {offsets = [0, 0], sizes = [2, 16], strides = [1, 1]} : vector<2x128xf32> to vector<2x16xf32>
    %150 = vector.extract_strided_slice %147 {offsets = [0, 16], sizes = [2, 16], strides = [1, 1]} : vector<2x128xf32> to vector<2x16xf32>
    %151 = vector.extract_strided_slice %148 {offsets = [0, 32], sizes = [2, 16], strides = [1, 1]} : vector<2x128xf32> to vector<2x16xf32>
    %152 = vector.extract_strided_slice %147 {offsets = [0, 48], sizes = [2, 16], strides = [1, 1]} : vector<2x128xf32> to vector<2x16xf32>
    %153 = arith.mulf %150, %134 : vector<2x16xf32>
    %154 = arith.mulf %149, %151 : vector<2x16xf32>
    %155 = arith.addf %153, %154 : vector<2x16xf32>
    %156 = math.tanh %155 : vector<2x16xf32>
    %157 = arith.mulf %152, %156 : vector<2x16xf32>
    %c0_30 = arith.constant 0 : index
    %c96 = arith.constant 96 : index
    %158 = vector.load %arg7[%c0_30, %c96] : memref<2x256xf32, #tpu.memory_space<vmem>>, vector<2x16xf32>
    tpu.vector_store %arg7[%c0_30, %c96], %157 {strides = array<i32>} : memref<2x256xf32, #tpu.memory_space<vmem>>, vector<2x16xf32>,
    %159 = vector.extract_strided_slice %8 {offsets = [0, 7, 0], sizes = [2, 1, 128], strides = [1, 1, 1]} : vector<2x16x128xf32> to vector<2x1x128xf32>
    %160 = vector.shape_cast %159 : vector<2x1x128xf32> to vector<2x128xf32>
    %161 = arith.truncf %157 : vector<2x16xf32> to vector<2x16xbf16>
    %cst_31 = arith.constant dense<0.000000e+00> : vector<2x128xf32>
    %162 = tpu.matmul %161, %9, %cst_31 {dimension_numbers = #tpu.dot_dimension_numbers<[1], [0], [0], [1], [0, 0, 1, 1], [], []>} : vector<2x16xbf16>, vector<16x128xbf16>, vector<2x128xf32> -> vector<2x128xf32>
    %163 = arith.addf %160, %162 : vector<2x128xf32>
    %164 = arith.negf %163 : vector<2x128xf32>
    %165 = math.exp %164 : vector<2x128xf32>
    %cst_32 = arith.constant 1.000000e+00 : f32
    %166 = vector.broadcast %cst_32 : f32 to vector<2x128xf32>
    %167 = arith.addf %166, %165 : vector<2x128xf32>
    %168 = arith.divf %166, %167 : vector<2x128xf32>
    %169 = math.tanh %163 : vector<2x128xf32>
    %170 = vector.extract_strided_slice %168 {offsets = [0, 0], sizes = [2, 16], strides = [1, 1]} : vector<2x128xf32> to vector<2x16xf32>
    %171 = vector.extract_strided_slice %168 {offsets = [0, 16], sizes = [2, 16], strides = [1, 1]} : vector<2x128xf32> to vector<2x16xf32>
    %172 = vector.extract_strided_slice %169 {offsets = [0, 32], sizes = [2, 16], strides = [1, 1]} : vector<2x128xf32> to vector<2x16xf32>
    %173 = vector.extract_strided_slice %168 {offsets = [0, 48], sizes = [2, 16], strides = [1, 1]} : vector<2x128xf32> to vector<2x16xf32>
    %174 = arith.mulf %171, %155 : vector<2x16xf32>
    %175 = arith.mulf %170, %172 : vector<2x16xf32>
    %176 = arith.addf %174, %175 : vector<2x16xf32>
    %177 = math.tanh %176 : vector<2x16xf32>
    %178 = arith.mulf %173, %177 : vector<2x16xf32>
    %c0_33 = arith.constant 0 : index
    %c112 = arith.constant 112 : index
    %179 = vector.load %arg7[%c0_33, %c112] : memref<2x256xf32, #tpu.memory_space<vmem>>, vector<2x16xf32>
    tpu.vector_store %arg7[%c0_33, %c112], %178 {strides = array<i32>} : memref<2x256xf32, #tpu.memory_space<vmem>>, vector<2x16xf32>,
    %180 = vector.extract_strided_slice %8 {offsets = [0, 8, 0], sizes = [2, 1, 128], strides = [1, 1, 1]} : vector<2x16x128xf32> to vector<2x1x128xf32>
    %181 = vector.shape_cast %180 : vector<2x1x128xf32> to vector<2x128xf32>
    %182 = arith.truncf %178 : vector<2x16xf32> to vector<2x16xbf16>
    %cst_34 = arith.constant dense<0.000000e+00> : vector<2x128xf32>
    %183 = tpu.matmul %182, %9, %cst_34 {dimension_numbers = #tpu.dot_dimension_numbers<[1], [0], [0], [1], [0, 0, 1, 1], [], []>} : vector<2x16xbf16>, vector<16x128xbf16>, vector<2x128xf32> -> vector<2x128xf32>
    %184 = arith.addf %181, %183 : vector<2x128xf32>
    %185 = arith.negf %184 : vector<2x128xf32>
    %186 = math.exp %185 : vector<2x128xf32>
    %cst_35 = arith.constant 1.000000e+00 : f32
    %187 = vector.broadcast %cst_35 : f32 to vector<2x128xf32>
    %188 = arith.addf %187, %186 : vector<2x128xf32>
    %189 = arith.divf %187, %188 : vector<2x128xf32>
    %190 = math.tanh %184 : vector<2x128xf32>
    %191 = vector.extract_strided_slice %189 {offsets = [0, 0], sizes = [2, 16], strides = [1, 1]} : vector<2x128xf32> to vector<2x16xf32>
    %192 = vector.extract_strided_slice %189 {offsets = [0, 16], sizes = [2, 16], strides = [1, 1]} : vector<2x128xf32> to vector<2x16xf32>
    %193 = vector.extract_strided_slice %190 {offsets = [0, 32], sizes = [2, 16], strides = [1, 1]} : vector<2x128xf32> to vector<2x16xf32>
    %194 = vector.extract_strided_slice %189 {offsets = [0, 48], sizes = [2, 16], strides = [1, 1]} : vector<2x128xf32> to vector<2x16xf32>
    %195 = arith.mulf %192, %176 : vector<2x16xf32>
    %196 = arith.mulf %191, %193 : vector<2x16xf32>
    %197 = arith.addf %195, %196 : vector<2x16xf32>
    %198 = math.tanh %197 : vector<2x16xf32>
    %199 = arith.mulf %194, %198 : vector<2x16xf32>
    %c0_36 = arith.constant 0 : index
    %c128 = arith.constant 128 : index
    %200 = vector.load %arg7[%c0_36, %c128] : memref<2x256xf32, #tpu.memory_space<vmem>>, vector<2x16xf32>
    tpu.vector_store %arg7[%c0_36, %c128], %199 {strides = array<i32>} : memref<2x256xf32, #tpu.memory_space<vmem>>, vector<2x16xf32>,
    %201 = vector.extract_strided_slice %8 {offsets = [0, 9, 0], sizes = [2, 1, 128], strides = [1, 1, 1]} : vector<2x16x128xf32> to vector<2x1x128xf32>
    %202 = vector.shape_cast %201 : vector<2x1x128xf32> to vector<2x128xf32>
    %203 = arith.truncf %199 : vector<2x16xf32> to vector<2x16xbf16>
    %cst_37 = arith.constant dense<0.000000e+00> : vector<2x128xf32>
    %204 = tpu.matmul %203, %9, %cst_37 {dimension_numbers = #tpu.dot_dimension_numbers<[1], [0], [0], [1], [0, 0, 1, 1], [], []>} : vector<2x16xbf16>, vector<16x128xbf16>, vector<2x128xf32> -> vector<2x128xf32>
    %205 = arith.addf %202, %204 : vector<2x128xf32>
    %206 = arith.negf %205 : vector<2x128xf32>
    %207 = math.exp %206 : vector<2x128xf32>
    %cst_38 = arith.constant 1.000000e+00 : f32
    %208 = vector.broadcast %cst_38 : f32 to vector<2x128xf32>
    %209 = arith.addf %208, %207 : vector<2x128xf32>
    %210 = arith.divf %208, %209 : vector<2x128xf32>
    %211 = math.tanh %205 : vector<2x128xf32>
    %212 = vector.extract_strided_slice %210 {offsets = [0, 0], sizes = [2, 16], strides = [1, 1]} : vector<2x128xf32> to vector<2x16xf32>
    %213 = vector.extract_strided_slice %210 {offsets = [0, 16], sizes = [2, 16], strides = [1, 1]} : vector<2x128xf32> to vector<2x16xf32>
    %214 = vector.extract_strided_slice %211 {offsets = [0, 32], sizes = [2, 16], strides = [1, 1]} : vector<2x128xf32> to vector<2x16xf32>
    %215 = vector.extract_strided_slice %210 {offsets = [0, 48], sizes = [2, 16], strides = [1, 1]} : vector<2x128xf32> to vector<2x16xf32>
    %216 = arith.mulf %213, %197 : vector<2x16xf32>
    %217 = arith.mulf %212, %214 : vector<2x16xf32>
    %218 = arith.addf %216, %217 : vector<2x16xf32>
    %219 = math.tanh %218 : vector<2x16xf32>
    %220 = arith.mulf %215, %219 : vector<2x16xf32>
    %c0_39 = arith.constant 0 : index
    %c144 = arith.constant 144 : index
    %221 = vector.load %arg7[%c0_39, %c144] : memref<2x256xf32, #tpu.memory_space<vmem>>, vector<2x16xf32>
    tpu.vector_store %arg7[%c0_39, %c144], %220 {strides = array<i32>} : memref<2x256xf32, #tpu.memory_space<vmem>>, vector<2x16xf32>,
    %222 = vector.extract_strided_slice %8 {offsets = [0, 10, 0], sizes = [2, 1, 128], strides = [1, 1, 1]} : vector<2x16x128xf32> to vector<2x1x128xf32>
    %223 = vector.shape_cast %222 : vector<2x1x128xf32> to vector<2x128xf32>
    %224 = arith.truncf %220 : vector<2x16xf32> to vector<2x16xbf16>
    %cst_40 = arith.constant dense<0.000000e+00> : vector<2x128xf32>
    %225 = tpu.matmul %224, %9, %cst_40 {dimension_numbers = #tpu.dot_dimension_numbers<[1], [0], [0], [1], [0, 0, 1, 1], [], []>} : vector<2x16xbf16>, vector<16x128xbf16>, vector<2x128xf32> -> vector<2x128xf32>
    %226 = arith.addf %223, %225 : vector<2x128xf32>
    %227 = arith.negf %226 : vector<2x128xf32>
    %228 = math.exp %227 : vector<2x128xf32>
    %cst_41 = arith.constant 1.000000e+00 : f32
    %229 = vector.broadcast %cst_41 : f32 to vector<2x128xf32>
    %230 = arith.addf %229, %228 : vector<2x128xf32>
    %231 = arith.divf %229, %230 : vector<2x128xf32>
    %232 = math.tanh %226 : vector<2x128xf32>
    %233 = vector.extract_strided_slice %231 {offsets = [0, 0], sizes = [2, 16], strides = [1, 1]} : vector<2x128xf32> to vector<2x16xf32>
    %234 = vector.extract_strided_slice %231 {offsets = [0, 16], sizes = [2, 16], strides = [1, 1]} : vector<2x128xf32> to vector<2x16xf32>
    %235 = vector.extract_strided_slice %232 {offsets = [0, 32], sizes = [2, 16], strides = [1, 1]} : vector<2x128xf32> to vector<2x16xf32>
    %236 = vector.extract_strided_slice %231 {offsets = [0, 48], sizes = [2, 16], strides = [1, 1]} : vector<2x128xf32> to vector<2x16xf32>
    %237 = arith.mulf %234, %218 : vector<2x16xf32>
    %238 = arith.mulf %233, %235 : vector<2x16xf32>
    %239 = arith.addf %237, %238 : vector<2x16xf32>
    %240 = math.tanh %239 : vector<2x16xf32>
    %241 = arith.mulf %236, %240 : vector<2x16xf32>
    %c0_42 = arith.constant 0 : index
    %c160 = arith.constant 160 : index
    %242 = vector.load %arg7[%c0_42, %c160] : memref<2x256xf32, #tpu.memory_space<vmem>>, vector<2x16xf32>
    tpu.vector_store %arg7[%c0_42, %c160], %241 {strides = array<i32>} : memref<2x256xf32, #tpu.memory_space<vmem>>, vector<2x16xf32>,
    %243 = vector.extract_strided_slice %8 {offsets = [0, 11, 0], sizes = [2, 1, 128], strides = [1, 1, 1]} : vector<2x16x128xf32> to vector<2x1x128xf32>
    %244 = vector.shape_cast %243 : vector<2x1x128xf32> to vector<2x128xf32>
    %245 = arith.truncf %241 : vector<2x16xf32> to vector<2x16xbf16>
    %cst_43 = arith.constant dense<0.000000e+00> : vector<2x128xf32>
    %246 = tpu.matmul %245, %9, %cst_43 {dimension_numbers = #tpu.dot_dimension_numbers<[1], [0], [0], [1], [0, 0, 1, 1], [], []>} : vector<2x16xbf16>, vector<16x128xbf16>, vector<2x128xf32> -> vector<2x128xf32>
    %247 = arith.addf %244, %246 : vector<2x128xf32>
    %248 = arith.negf %247 : vector<2x128xf32>
    %249 = math.exp %248 : vector<2x128xf32>
    %cst_44 = arith.constant 1.000000e+00 : f32
    %250 = vector.broadcast %cst_44 : f32 to vector<2x128xf32>
    %251 = arith.addf %250, %249 : vector<2x128xf32>
    %252 = arith.divf %250, %251 : vector<2x128xf32>
    %253 = math.tanh %247 : vector<2x128xf32>
    %254 = vector.extract_strided_slice %252 {offsets = [0, 0], sizes = [2, 16], strides = [1, 1]} : vector<2x128xf32> to vector<2x16xf32>
    %255 = vector.extract_strided_slice %252 {offsets = [0, 16], sizes = [2, 16], strides = [1, 1]} : vector<2x128xf32> to vector<2x16xf32>
    %256 = vector.extract_strided_slice %253 {offsets = [0, 32], sizes = [2, 16], strides = [1, 1]} : vector<2x128xf32> to vector<2x16xf32>
    %257 = vector.extract_strided_slice %252 {offsets = [0, 48], sizes = [2, 16], strides = [1, 1]} : vector<2x128xf32> to vector<2x16xf32>
    %258 = arith.mulf %255, %239 : vector<2x16xf32>
    %259 = arith.mulf %254, %256 : vector<2x16xf32>
    %260 = arith.addf %258, %259 : vector<2x16xf32>
    %261 = math.tanh %260 : vector<2x16xf32>
    %262 = arith.mulf %257, %261 : vector<2x16xf32>
    %c0_45 = arith.constant 0 : index
    %c176 = arith.constant 176 : index
    %263 = vector.load %arg7[%c0_45, %c176] : memref<2x256xf32, #tpu.memory_space<vmem>>, vector<2x16xf32>
    tpu.vector_store %arg7[%c0_45, %c176], %262 {strides = array<i32>} : memref<2x256xf32, #tpu.memory_space<vmem>>, vector<2x16xf32>,
    %264 = vector.extract_strided_slice %8 {offsets = [0, 12, 0], sizes = [2, 1, 128], strides = [1, 1, 1]} : vector<2x16x128xf32> to vector<2x1x128xf32>
    %265 = vector.shape_cast %264 : vector<2x1x128xf32> to vector<2x128xf32>
    %266 = arith.truncf %262 : vector<2x16xf32> to vector<2x16xbf16>
    %cst_46 = arith.constant dense<0.000000e+00> : vector<2x128xf32>
    %267 = tpu.matmul %266, %9, %cst_46 {dimension_numbers = #tpu.dot_dimension_numbers<[1], [0], [0], [1], [0, 0, 1, 1], [], []>} : vector<2x16xbf16>, vector<16x128xbf16>, vector<2x128xf32> -> vector<2x128xf32>
    %268 = arith.addf %265, %267 : vector<2x128xf32>
    %269 = arith.negf %268 : vector<2x128xf32>
    %270 = math.exp %269 : vector<2x128xf32>
    %cst_47 = arith.constant 1.000000e+00 : f32
    %271 = vector.broadcast %cst_47 : f32 to vector<2x128xf32>
    %272 = arith.addf %271, %270 : vector<2x128xf32>
    %273 = arith.divf %271, %272 : vector<2x128xf32>
    %274 = math.tanh %268 : vector<2x128xf32>
    %275 = vector.extract_strided_slice %273 {offsets = [0, 0], sizes = [2, 16], strides = [1, 1]} : vector<2x128xf32> to vector<2x16xf32>
    %276 = vector.extract_strided_slice %273 {offsets = [0, 16], sizes = [2, 16], strides = [1, 1]} : vector<2x128xf32> to vector<2x16xf32>
    %277 = vector.extract_strided_slice %274 {offsets = [0, 32], sizes = [2, 16], strides = [1, 1]} : vector<2x128xf32> to vector<2x16xf32>
    %278 = vector.extract_strided_slice %273 {offsets = [0, 48], sizes = [2, 16], strides = [1, 1]} : vector<2x128xf32> to vector<2x16xf32>
    %279 = arith.mulf %276, %260 : vector<2x16xf32>
    %280 = arith.mulf %275, %277 : vector<2x16xf32>
    %281 = arith.addf %279, %280 : vector<2x16xf32>
    %282 = math.tanh %281 : vector<2x16xf32>
    %283 = arith.mulf %278, %282 : vector<2x16xf32>
    %c0_48 = arith.constant 0 : index
    %c192 = arith.constant 192 : index
    %284 = vector.load %arg7[%c0_48, %c192] : memref<2x256xf32, #tpu.memory_space<vmem>>, vector<2x16xf32>
    tpu.vector_store %arg7[%c0_48, %c192], %283 {strides = array<i32>} : memref<2x256xf32, #tpu.memory_space<vmem>>, vector<2x16xf32>,
    %285 = vector.extract_strided_slice %8 {offsets = [0, 13, 0], sizes = [2, 1, 128], strides = [1, 1, 1]} : vector<2x16x128xf32> to vector<2x1x128xf32>
    %286 = vector.shape_cast %285 : vector<2x1x128xf32> to vector<2x128xf32>
    %287 = arith.truncf %283 : vector<2x16xf32> to vector<2x16xbf16>
    %cst_49 = arith.constant dense<0.000000e+00> : vector<2x128xf32>
    %288 = tpu.matmul %287, %9, %cst_49 {dimension_numbers = #tpu.dot_dimension_numbers<[1], [0], [0], [1], [0, 0, 1, 1], [], []>} : vector<2x16xbf16>, vector<16x128xbf16>, vector<2x128xf32> -> vector<2x128xf32>
    %289 = arith.addf %286, %288 : vector<2x128xf32>
    %290 = arith.negf %289 : vector<2x128xf32>
    %291 = math.exp %290 : vector<2x128xf32>
    %cst_50 = arith.constant 1.000000e+00 : f32
    %292 = vector.broadcast %cst_50 : f32 to vector<2x128xf32>
    %293 = arith.addf %292, %291 : vector<2x128xf32>
    %294 = arith.divf %292, %293 : vector<2x128xf32>
    %295 = math.tanh %289 : vector<2x128xf32>
    %296 = vector.extract_strided_slice %294 {offsets = [0, 0], sizes = [2, 16], strides = [1, 1]} : vector<2x128xf32> to vector<2x16xf32>
    %297 = vector.extract_strided_slice %294 {offsets = [0, 16], sizes = [2, 16], strides = [1, 1]} : vector<2x128xf32> to vector<2x16xf32>
    %298 = vector.extract_strided_slice %295 {offsets = [0, 32], sizes = [2, 16], strides = [1, 1]} : vector<2x128xf32> to vector<2x16xf32>
    %299 = vector.extract_strided_slice %294 {offsets = [0, 48], sizes = [2, 16], strides = [1, 1]} : vector<2x128xf32> to vector<2x16xf32>
    %300 = arith.mulf %297, %281 : vector<2x16xf32>
    %301 = arith.mulf %296, %298 : vector<2x16xf32>
    %302 = arith.addf %300, %301 : vector<2x16xf32>
    %303 = math.tanh %302 : vector<2x16xf32>
    %304 = arith.mulf %299, %303 : vector<2x16xf32>
    %c0_51 = arith.constant 0 : index
    %c208 = arith.constant 208 : index
    %305 = vector.load %arg7[%c0_51, %c208] : memref<2x256xf32, #tpu.memory_space<vmem>>, vector<2x16xf32>
    tpu.vector_store %arg7[%c0_51, %c208], %304 {strides = array<i32>} : memref<2x256xf32, #tpu.memory_space<vmem>>, vector<2x16xf32>,
    %306 = vector.extract_strided_slice %8 {offsets = [0, 14, 0], sizes = [2, 1, 128], strides = [1, 1, 1]} : vector<2x16x128xf32> to vector<2x1x128xf32>
    %307 = vector.shape_cast %306 : vector<2x1x128xf32> to vector<2x128xf32>
    %308 = arith.truncf %304 : vector<2x16xf32> to vector<2x16xbf16>
    %cst_52 = arith.constant dense<0.000000e+00> : vector<2x128xf32>
    %309 = tpu.matmul %308, %9, %cst_52 {dimension_numbers = #tpu.dot_dimension_numbers<[1], [0], [0], [1], [0, 0, 1, 1], [], []>} : vector<2x16xbf16>, vector<16x128xbf16>, vector<2x128xf32> -> vector<2x128xf32>
    %310 = arith.addf %307, %309 : vector<2x128xf32>
    %311 = arith.negf %310 : vector<2x128xf32>
    %312 = math.exp %311 : vector<2x128xf32>
    %cst_53 = arith.constant 1.000000e+00 : f32
    %313 = vector.broadcast %cst_53 : f32 to vector<2x128xf32>
    %314 = arith.addf %313, %312 : vector<2x128xf32>
    %315 = arith.divf %313, %314 : vector<2x128xf32>
    %316 = math.tanh %310 : vector<2x128xf32>
    %317 = vector.extract_strided_slice %315 {offsets = [0, 0], sizes = [2, 16], strides = [1, 1]} : vector<2x128xf32> to vector<2x16xf32>
    %318 = vector.extract_strided_slice %315 {offsets = [0, 16], sizes = [2, 16], strides = [1, 1]} : vector<2x128xf32> to vector<2x16xf32>
    %319 = vector.extract_strided_slice %316 {offsets = [0, 32], sizes = [2, 16], strides = [1, 1]} : vector<2x128xf32> to vector<2x16xf32>
    %320 = vector.extract_strided_slice %315 {offsets = [0, 48], sizes = [2, 16], strides = [1, 1]} : vector<2x128xf32> to vector<2x16xf32>
    %321 = arith.mulf %318, %302 : vector<2x16xf32>
    %322 = arith.mulf %317, %319 : vector<2x16xf32>
    %323 = arith.addf %321, %322 : vector<2x16xf32>
    %324 = math.tanh %323 : vector<2x16xf32>
    %325 = arith.mulf %320, %324 : vector<2x16xf32>
    %c0_54 = arith.constant 0 : index
    %c224 = arith.constant 224 : index
    %326 = vector.load %arg7[%c0_54, %c224] : memref<2x256xf32, #tpu.memory_space<vmem>>, vector<2x16xf32>
    tpu.vector_store %arg7[%c0_54, %c224], %325 {strides = array<i32>} : memref<2x256xf32, #tpu.memory_space<vmem>>, vector<2x16xf32>,
    %327 = vector.extract_strided_slice %8 {offsets = [0, 15, 0], sizes = [2, 1, 128], strides = [1, 1, 1]} : vector<2x16x128xf32> to vector<2x1x128xf32>
    %328 = vector.shape_cast %327 : vector<2x1x128xf32> to vector<2x128xf32>
    %329 = arith.truncf %325 : vector<2x16xf32> to vector<2x16xbf16>
    %cst_55 = arith.constant dense<0.000000e+00> : vector<2x128xf32>
    %330 = tpu.matmul %329, %9, %cst_55 {dimension_numbers = #tpu.dot_dimension_numbers<[1], [0], [0], [1], [0, 0, 1, 1], [], []>} : vector<2x16xbf16>, vector<16x128xbf16>, vector<2x128xf32> -> vector<2x128xf32>
    %331 = arith.addf %328, %330 : vector<2x128xf32>
    %332 = arith.negf %331 : vector<2x128xf32>
    %333 = math.exp %332 : vector<2x128xf32>
    %cst_56 = arith.constant 1.000000e+00 : f32
    %334 = vector.broadcast %cst_56 : f32 to vector<2x128xf32>
    %335 = arith.addf %334, %333 : vector<2x128xf32>
    %336 = arith.divf %334, %335 : vector<2x128xf32>
    %337 = math.tanh %331 : vector<2x128xf32>
    %338 = vector.extract_strided_slice %336 {offsets = [0, 0], sizes = [2, 16], strides = [1, 1]} : vector<2x128xf32> to vector<2x16xf32>
    %339 = vector.extract_strided_slice %336 {offsets = [0, 16], sizes = [2, 16], strides = [1, 1]} : vector<2x128xf32> to vector<2x16xf32>
    %340 = vector.extract_strided_slice %337 {offsets = [0, 32], sizes = [2, 16], strides = [1, 1]} : vector<2x128xf32> to vector<2x16xf32>
    %341 = vector.extract_strided_slice %336 {offsets = [0, 48], sizes = [2, 16], strides = [1, 1]} : vector<2x128xf32> to vector<2x16xf32>
    %342 = arith.mulf %339, %323 : vector<2x16xf32>
    %343 = arith.mulf %338, %340 : vector<2x16xf32>
    %344 = arith.addf %342, %343 : vector<2x16xf32>
    %345 = math.tanh %344 : vector<2x16xf32>
    %346 = arith.mulf %341, %345 : vector<2x16xf32>
    %c0_57 = arith.constant 0 : index
    %c240 = arith.constant 240 : index
    %347 = vector.load %arg7[%c0_57, %c240] : memref<2x256xf32, #tpu.memory_space<vmem>>, vector<2x16xf32>
    tpu.vector_store %arg7[%c0_57, %c240], %346 {strides = array<i32>} : memref<2x256xf32, #tpu.memory_space<vmem>>, vector<2x16xf32>,
    %c0_58 = arith.constant 0 : index
    %c0_59 = arith.constant 0 : index
    %348 = vector.load %arg7[%c0_58, %c0_59] : memref<2x256xf32, #tpu.memory_space<vmem>>, vector<2x256xf32>
    %349 = arith.truncf %348 : vector<2x256xf32> to vector<2x256xbf16>
    %c0_60 = arith.constant 0 : index
    %c0_61 = arith.constant 0 : index
    %350 = vector.load %arg4[%c0_60, %c0_61] : memref<256x128xbf16, #tpu.memory_space<vmem>>, vector<256x128xbf16>
    %cst_62 = arith.constant dense<0.000000e+00> : vector<2x128xf32>
    %351 = tpu.matmul %349, %350, %cst_62 {dimension_numbers = #tpu.dot_dimension_numbers<[1], [0], [0], [1], [0, 0, 1, 1], [], []>} : vector<2x256xbf16>, vector<256x128xbf16>, vector<2x128xf32> -> vector<2x128xf32>
    %c0_63 = arith.constant 0 : index
    %c0_64 = arith.constant 0 : index
    %352 = vector.load %arg5[%c0_63, %c0_64] : memref<1x128xf32, #tpu.memory_space<vmem>>, vector<1x128xf32>
    %353 = vector.shape_cast %352 : vector<1x128xf32> to vector<1x128xf32>
    %354 = vector.broadcast %353 : vector<1x128xf32> to vector<2x128xf32>
    %355 = arith.addf %351, %354 : vector<2x128xf32>
    %c0_65 = arith.constant 0 : index
    %c0_66 = arith.constant 0 : index
    %356 = vector.load %arg6[%c0_65, %c0_66] : memref<2x128xf32, #tpu.memory_space<vmem>>, vector<2x128xf32>
    tpu.vector_store %arg6[%c0_65, %c0_66], %355 {strides = array<i32>} : memref<2x128xf32, #tpu.memory_space<vmem>>, vector<2x128xf32>,
    return
  }
}

</mosaic_0001>

<llo_original>
// kernel: rnn_model_forward.1
$region0: #{rnn_model_forward.1}
  #allocation0 [shape = 'u32[]', space=smem, size = 0x4, offset = 0x4, fixed_abs, tag = 'smem constant byte address 0x4 - core index']
  #allocation1 [shape = 'u32[144,128]{1,0:T(1,128)}', space=vmem, size = 0x12000, scoped, tag = 'internal scratch']
  #allocation2 [shape = 'f32[2,256]{1,0:T(2,128)}', space=vmem, size = 0x800, scoped, tag = 'scratch operand']
  %s0 = inlined_call_operand.vmem [shape: f32[32,8], index: 0, kind: input, shape index: {}]
  %s1 = inlined_call_operand.vmem [shape: bf16[8,128], index: 1, kind: input, shape index: {}]
  %s2 = inlined_call_operand.vmem [shape: bf16[16,128], index: 2, kind: input, shape index: {}]
  %s3 = inlined_call_operand.vmem [shape: f32[1,128], index: 3, kind: input, shape index: {}]
  %s4 = inlined_call_operand.hbm [shape: bf16[256,128], index: 4, kind: input, shape index: {}]
  %s5 = inlined_call_operand.vmem [shape: f32[1,128], index: 5, kind: input, shape index: {}]
  %s6 = inlined_call_operand.hbm [shape: f32[2,128], index: 6, kind: output, shape index: {}]
  %s7 = sld [smem:[#allocation0]]
  $region38: #{rnn_model_forward.1} parent=0
    _
  %s9 = ssub.s32 1, %s7
  %s10 = scalar_select 0, %s9, %s7
  $region1: #{rnn_model_forward.1} parent=0
    #allocation3 [shape = 'u8[65536]{0}', space=vmem, size = 0x10000, scoped, tag = 'input window, operand 4, single buffered']
    #allocation4 [shape = 's32[1]{0}', space=sflag, size = 0x4, scoped, tag = 'scoped memory for rnn_model_forward.1']
    #allocation5 [shape = 's32[1]{0}', space=sflag, size = 0x4, scoped, tag = 'scoped memory for rnn_model_forward.1']
    #allocation6 [shape = 'u8[1024]{0}', space=vmem, size = 0x400, scoped, tag = 'output window, operand 0, single buffered']
    %11 = vsyncpa [#allocation4], 0
    %12 = vsyncpa [#allocation5], 0
    // Predicated region
    $region2: #{rnn_model_forward.1} parent=1 // pred_check
      _
    $region3: #{rnn_model_forward.1} parent=1 // pred_check_branch
      %14 = sbr.rel (0) target = $region5
    $region4: #{rnn_model_forward.1} parent=1 // pred_region
      _
    $region5: #{rnn_model_forward.1} parent=1 // pred_fallthru
      _
    // Predicated region
    $region6: #{rnn_model_forward.1} parent=1 // pred_check
      _
    $region7: #{rnn_model_forward.1} parent=1 // pred_check_branch
      %16 = sbr.rel (0) target = $region9
    $region8: #{rnn_model_forward.1} parent=1 // pred_region
      _
    $region9: #{rnn_model_forward.1} parent=1 // pred_fallthru
      _
    // Predicated region
    $region10: #{rnn_model_forward.1} parent=1 // pred_check
      _
    $region11: #{rnn_model_forward.1} parent=1 // pred_check_branch
      %18 = sbr.rel (0) target = $region13
    $region12: #{rnn_model_forward.1} parent=1 // pred_region
      _
    $region13: #{rnn_model_forward.1} parent=1 // pred_fallthru
      _
    // Predicated region
    $region14: #{rnn_model_forward.1} parent=1 // pred_check
      _
    $region15: #{rnn_model_forward.1} parent=1 // pred_check_branch
      %20 = sbr.rel (0) target = $region17
    $region16: #{rnn_model_forward.1} parent=1 // pred_region
      _
    $region17: #{rnn_model_forward.1} parent=1 // pred_fallthru
      _
    // Predicated region
    $region18: #{rnn_model_forward.1} parent=1 // pred_check
      _
    $region19: #{rnn_model_forward.1} parent=1 // pred_check_branch
      %22 = sbr.rel (0) target = $region21
    $region20: #{rnn_model_forward.1} parent=1 // pred_region
      %s24 = ssub.s32 2048, 2048
      %25 = vsyncadd [#allocation4], %s24
      %s26 = sshll.u32 [#allocation3], 4
      %s27 = int_to_ptr.vmem [resolvable:$true] %s26
      %32 = dma.hbm_to_vmem [thread:$0]  %s4, 2048, %s27, [#allocation4], 64, 64, 4
    $region21: #{rnn_model_forward.1} parent=1 // pred_fallthru
      _
    // Predicated region
    $region22: #{rnn_model_forward.1} parent=1 // pred_check
      _
    $region23: #{rnn_model_forward.1} parent=1 // pred_check_branch
      %34 = sbr.rel (0) target = $region25
    $region24: #{rnn_model_forward.1} parent=1 // pred_region
      _
    $region25: #{rnn_model_forward.1} parent=1 // pred_fallthru
      _
    // Predicated region
    $region26: #{rnn_model_forward.1} parent=1 // pred_check
      _
    $region27: #{rnn_model_forward.1} parent=1 // pred_check_branch
      %36 = sbr.rel (0) target = $region29
    $region28: #{rnn_model_forward.1} parent=1 // pred_region
      %37 = dma.done [#allocation4], 2048
    $region29: #{rnn_model_forward.1} parent=1 // pred_fallthru
      _
    %v39 = vld [vmem:[%s0] sm:$0xff]
    %v40 = vld [vmem:[%s0 + $0x8] sm:$0xff]
    %v41 = vld [vmem:[%s0 + $0x10] sm:$0xff]
    %v42 = vld [vmem:[%s0 + $0x18] sm:$0xff]
    %v43 = vpack.c.bf16 %v40, %v39
    %v44 = vpack.c.bf16 %v42, %v41
    %v45 = vld [vmem:[%s1] sm:$0xf]
    %v46 = vld [vmem:[%s3] sm:$0x1]
    %v48 = vlaneseq
    %v49 = vshrl.u32 %v48, 7
    %v50 = vsub.s32 0, %v49
    %v51 = vrot.slane %v46, %v50
    %vm53 = vcmask 64512
    %v55 = vsel %vm53, %v43, 0
    %v58 = vsel %vm53, %v44, 0
    %vm60 = vcmask 1043456
    %v62 = vsel %vm60, %v45, 0
    %64 = vmatprep.subr.bf16.mxu0 0
    %65 = vmatpush1.bf16.msra.mxu0 %v62
    %66 = vmatprep.subr.bf16.mxu0 0
    %67 = vmatpush1.bf16.msra.mxu0 0
    %68 = vmatprep.subr.bf16.mxu0 0
    %69 = vmatpush1.bf16.msra.mxu0 0
    %70 = vmatprep.subr.bf16.mxu0 0
    %71 = vmatpush1.bf16.msra.mxu0 0
    %72 = vmatprep.subr.bf16.mxu0 0
    %73 = vmatpush1.bf16.msra.mxu0 0
    %74 = vmatprep.subr.bf16.mxu0 0
    %75 = vmatpush1.bf16.msra.mxu0 0
    %76 = vmatprep.subr.bf16.mxu0 0
    %77 = vmatpush1.bf16.msra.mxu0 0
    %78 = vmatprep.subr.bf16.mxu0 0
    %79 = vmatpush1.bf16.msra.mxu0 0
    %80 = vmatprep.subr.bf16.mxu0 0
    %81 = vmatpush1.bf16.msra.mxu0 0
    %82 = vmatprep.subr.bf16.mxu0 0
    %83 = vmatpush1.bf16.msra.mxu0 0
    %84 = vmatprep.subr.bf16.mxu0 0
    %85 = vmatpush1.bf16.msra.mxu0 0
    %86 = vmatprep.subr.bf16.mxu0 0
    %87 = vmatpush1.bf16.msra.mxu0 0
    %88 = vmatprep.subr.bf16.mxu0 0
    %89 = vmatpush1.bf16.msra.mxu0 0
    %90 = vmatprep.subr.bf16.mxu0 0
    %91 = vmatpush1.bf16.msra.mxu0 0
    %92 = vmatprep.subr.bf16.mxu0 0
    %93 = vmatpush1.bf16.msra.mxu0 0
    %94 = vmatprep.subr.bf16.mxu0 0
    %95 = vmatpush1.bf16.msra.mxu0 0
    %96 = vmatprep.mubr.bf16.mxu0 0
    %97 = vmatmul.mubr.bf16.gmra.mrb[0].mxu0 %v55
    %v98 = vpop.f32.mrb[0].mxu0
    %v99 = vadd.f32 %v51, %v98
    %v100 = vpop.f32.mrb[0].mxu0
    %v101 = vpop.f32.mrb[0].mxu0
    %v102 = vadd.f32 %v51, %v101
    %v103 = vpop.f32.mrb[0].mxu0
    %104 = vmatprep.mubr.bf16.mxu0 0
    %105 = vmatmul.mubr.bf16.gmra.mrb[0].mxu0 %v58
    %v106 = vpop.f32.mrb[0].mxu0
    %v107 = vadd.f32 %v51, %v106
    %v108 = vpop.f32.mrb[0].mxu0
    %v109 = vpop.f32.mrb[0].mxu0
    %v110 = vadd.f32 %v51, %v109
    %v111 = vpop.f32.mrb[0].mxu0
    %112 = vdwg.mxu0
    %v113 = vld [vmem:[%s2] sm:$0xf]
    %v114 = vld [vmem:[%s2 + $0x4] sm:$0xf]
    %v117 = vunpack.c.l.b16 %v113
    %v118 = vunpack.c.l.b16 %v114
    %v119 = vpack.c.b16 %v118, %v117
    %vm121 = vcmask 130048
    %v123 = vsel %vm121, 0, 0
    %125 = vmatprep.subr.bf16.mxu0 0
    %126 = vmatpush1.bf16.msra.mxu0 %v119
    %127 = vmatprep.subr.bf16.mxu0 0
    %128 = vmatpush1.bf16.msra.mxu0 0
    %129 = vmatprep.subr.bf16.mxu0 0
    %130 = vmatpush1.bf16.msra.mxu0 0
    %131 = vmatprep.subr.bf16.mxu0 0
    %132 = vmatpush1.bf16.msra.mxu0 0
    %133 = vmatprep.subr.bf16.mxu0 0
    %134 = vmatpush1.bf16.msra.mxu0 0
    %135 = vmatprep.subr.bf16.mxu0 0
    %136 = vmatpush1.bf16.msra.mxu0 0
    %137 = vmatprep.subr.bf16.mxu0 0
    %138 = vmatpush1.bf16.msra.mxu0 0
    %139 = vmatprep.subr.bf16.mxu0 0
    %140 = vmatpush1.bf16.msra.mxu0 0
    %141 = vmatprep.subr.bf16.mxu0 0
    %142 = vmatpush1.bf16.msra.mxu0 0
    %143 = vmatprep.subr.bf16.mxu0 0
    %144 = vmatpush1.bf16.msra.mxu0 0
    %145 = vmatprep.subr.bf16.mxu0 0
    %146 = vmatpush1.bf16.msra.mxu0 0
    %147 = vmatprep.subr.bf16.mxu0 0
    %148 = vmatpush1.bf16.msra.mxu0 0
    %149 = vmatprep.subr.bf16.mxu0 0
    %150 = vmatpush1.bf16.msra.mxu0 0
    %151 = vmatprep.subr.bf16.mxu0 0
    %152 = vmatpush1.bf16.msra.mxu0 0
    %153 = vmatprep.subr.bf16.mxu0 0
    %154 = vmatpush1.bf16.msra.mxu0 0
    %155 = vmatprep.subr.bf16.mxu0 0
    %156 = vmatpush1.bf16.msra.mxu0 0
    %157 = vmatprep.mubr.bf16.mxu0 0
    %158 = vmatmul.mubr.bf16.gmra.mrb[0].mxu0 %v123
    %v159 = vpop.f32.mrb[0].mxu0
    %v160 = vadd.f32 0.0, %v159
    %v161 = vpop.f32.mrb[0].mxu0
    %v162 = vpop.f32.mrb[0].mxu0
    %v163 = vpop.f32.mrb[0].mxu0
    %164 = vdwg.mxu0
    %v166 = vrot.slane %v160, 1
    %v169 = vadd.f32 %v99, %v160
    %v170 = vadd.f32 %v107, %v166
    %v171 = vxor.u32 %v169, 2147483648
    %v172 = vxor.u32 %v170, 2147483648
    %v173 = vmul.f32 %v171, 1.442695
    %v174 = vpow.pop %v173
    %v175 = vmul.f32 %v172, 1.442695
    %v176 = vpow.pop %v175
    %v177 = vadd.f32 %v174, 1.0
    %v178 = vadd.f32 %v176, 1.0
    %v179 = vrcp.pop %v177
    %v180 = vmul.f32 1.0, %v179
    %v181 = vrcp.pop %v178
    %v182 = vmul.f32 1.0, %v181
    %v183 = vtanh.pop %v169
    %v184 = vtanh.pop %v170
    %v185 = vmul.f32 %v180, 0.0
    %v186 = vmul.f32 %v182, 0.0
    %189 = vrot.lane.b32.xlu0 %v183, 96
    %v190 = vpop.permute.xlu0 %189
    %191 = vrot.lane.b32.xlu0 %v184, 96
    %v192 = vpop.permute.xlu0 %191
    %v195 = vmul.f32 %v180, %v190
    %v196 = vmul.f32 %v182, %v192
    %199 = vrot.lane.b32.xlu0 %v195, 16
    %v200 = vpop.permute.xlu0 %199
    %201 = vrot.lane.b32.xlu0 %v196, 16
    %v202 = vpop.permute.xlu0 %201
    %v205 = vadd.f32 %v185, %v200
    %v206 = vadd.f32 %v186, %v202
    %v207 = vtanh.pop %v205
    %v208 = vtanh.pop %v206
    %211 = vrot.lane.b32.xlu0 %v207, 32
    %v212 = vpop.permute.xlu0 %211
    %213 = vrot.lane.b32.xlu0 %v208, 32
    %v214 = vpop.permute.xlu0 %213
    %v217 = vmul.f32 %v180, %v212
    %v218 = vmul.f32 %v182, %v214
    %v222 = vunpack.c.l.s4 1983009808
    %v223 = vunpack.c.0.s8 %v222
    %v224 = vlaneseq
    %v225 = vshrl.u32 %v224, 7
    %v226 = vsub.s32 %v223, %v225
    %v227 = vrot.slane %v217, %v226
    %v229 = vunpack.c.l.s4 1983009808
    %v230 = vunpack.c.0.s8 %v229
    %v231 = vlaneseq
    %v232 = vshrl.u32 %v231, 7
    %v233 = vsub.s32 %v230, %v232
    %v234 = vrot.slane %v218, %v233
    %vm235 = vcmask 1044484
    %v236 = vsel %vm235, %v227, %v227
    %vm237 = vcmask 1046534
    %v238 = vsel %vm237, %v227, %v236
    %v239 = vrot.slane %v234, 7
    %vm240 = vcmask 1041409
    %v241 = vsel %vm240, %v239, %v238
    %vm242 = vcmask 1043459
    %v243 = vsel %vm242, %v239, %v241
    %vm244 = vcmask 1045509
    %v245 = vsel %vm244, %v239, %v243
    %vm246 = vcmask 1047559
    %v247 = vsel %vm246, %v239, %v245
    %248 = vrot.lane.b32.xlu0 %v247, 80
    %v249 = vpop.permute.xlu0 %248
    %vm251 = vcmask 123904
    %252 = vst.msk [vmem:[#allocation2] sm:$0x3] %vm251, %v249
    %v253 = vpack.c.bf16 %v217, %v217
    %v254 = vpack.c.bf16 %v218, %v218
    %v257 = vunpack.c.l.b16 %v253
    %v258 = vunpack.c.l.b16 %v254
    %v259 = vrot.slane %v258, 7
    %v260 = vsel %vm240, %v259, %v257
    %v261 = vpack.c.b16 %v260, %v260
    %262 = vrot.lane.b32.xlu0 %v261, 80
    %v263 = vpop.permute.xlu0 %262
    %v265 = vsel %vm121, %v263, 0
    %267 = vmatprep.subr.bf16.mxu0 0
    %268 = vmatpush1.bf16.msra.mxu0 %v119
    %269 = vmatprep.subr.bf16.mxu0 0
    %270 = vmatpush1.bf16.msra.mxu0 0
    %271 = vmatprep.subr.bf16.mxu0 0
    %272 = vmatpush1.bf16.msra.mxu0 0
    %273 = vmatprep.subr.bf16.mxu0 0
    %274 = vmatpush1.bf16.msra.mxu0 0
    %275 = vmatprep.subr.bf16.mxu0 0
    %276 = vmatpush1.bf16.msra.mxu0 0
    %277 = vmatprep.subr.bf16.mxu0 0
    %278 = vmatpush1.bf16.msra.mxu0 0
    %279 = vmatprep.subr.bf16.mxu0 0
    %280 = vmatpush1.bf16.msra.mxu0 0
    %281 = vmatprep.subr.bf16.mxu0 0
    %282 = vmatpush1.bf16.msra.mxu0 0
    %283 = vmatprep.subr.bf16.mxu0 0
    %284 = vmatpush1.bf16.msra.mxu0 0
    %285 = vmatprep.subr.bf16.mxu0 0
    %286 = vmatpush1.bf16.msra.mxu0 0
    %287 = vmatprep.subr.bf16.mxu0 0
    %288 = vmatpush1.bf16.msra.mxu0 0
    %289 = vmatprep.subr.bf16.mxu0 0
    %290 = vmatpush1.bf16.msra.mxu0 0
    %291 = vmatprep.subr.bf16.mxu0 0
    %292 = vmatpush1.bf16.msra.mxu0 0
    %293 = vmatprep.subr.bf16.mxu0 0
    %294 = vmatpush1.bf16.msra.mxu0 0
    %295 = vmatprep.subr.bf16.mxu0 0
    %296 = vmatpush1.bf16.msra.mxu0 0
    %297 = vmatprep.subr.bf16.mxu0 0
    %298 = vmatpush1.bf16.msra.mxu0 0
    %299 = vmatprep.mubr.bf16.mxu0 0
    %300 = vmatmul.mubr.bf16.gmra.mrb[0].mxu0 %v265
    %v301 = vpop.f32.mrb[0].mxu0
    %v302 = vadd.f32 0.0, %v301
    %v303 = vpop.f32.mrb[0].mxu0
    %v304 = vpop.f32.mrb[0].mxu0
    %v305 = vpop.f32.mrb[0].mxu0
    %306 = vdwg.mxu0
    %v308 = vrot.slane %v302, 7
    %v311 = vadd.f32 %v99, %v308
    %v312 = vadd.f32 %v107, %v302
    %v313 = vxor.u32 %v311, 2147483648
    %v314 = vxor.u32 %v312, 2147483648
    %v315 = vmul.f32 %v313, 1.442695
    %v316 = vpow.pop %v315
    %v317 = vmul.f32 %v314, 1.442695
    %v318 = vpow.pop %v317
    %v319 = vadd.f32 %v316, 1.0
    %v320 = vadd.f32 %v318, 1.0
    %v321 = vrcp.pop %v319
    %v322 = vmul.f32 1.0, %v321
    %v323 = vrcp.pop %v320
    %v324 = vmul.f32 1.0, %v323
    %v325 = vtanh.pop %v311
    %v326 = vtanh.pop %v312
    %v329 = vrot.slane %v205, 7
    %v330 = vrot.slane %v206, 7
    %v333 = vmul.f32 %v322, %v329
    %v334 = vmul.f32 %v324, %v330
    %337 = vrot.lane.b32.xlu0 %v325, 96
    %v338 = vpop.permute.xlu0 %337
    %339 = vrot.lane.b32.xlu0 %v326, 96
    %v340 = vpop.permute.xlu0 %339
    %v343 = vmul.f32 %v322, %v338
    %v344 = vmul.f32 %v324, %v340
    %347 = vrot.lane.b32.xlu0 %v343, 16
    %v348 = vpop.permute.xlu0 %347
    %349 = vrot.lane.b32.xlu0 %v344, 16
    %v350 = vpop.permute.xlu0 %349
    %v353 = vadd.f32 %v333, %v348
    %v354 = vadd.f32 %v334, %v350
    %v355 = vtanh.pop %v353
    %v356 = vtanh.pop %v354
    %359 = vrot.lane.b32.xlu0 %v355, 32
    %v360 = vpop.permute.xlu0 %359
    %361 = vrot.lane.b32.xlu0 %v356, 32
    %v362 = vpop.permute.xlu0 %361
    %v365 = vmul.f32 %v322, %v360
    %v366 = vmul.f32 %v324, %v362
    %v370 = vunpack.c.l.s4 1983009808
    %v371 = vunpack.c.0.s8 %v370
    %v372 = vlaneseq
    %v373 = vshrl.u32 %v372, 7
    %v374 = vsub.s32 %v371, %v373
    %v375 = vrot.slane %v365, %v374
    %v377 = vunpack.c.l.s4 1983009808
    %v378 = vunpack.c.0.s8 %v377
    %v379 = vlaneseq
    %v380 = vshrl.u32 %v379, 7
    %v381 = vsub.s32 %v378, %v380
    %v382 = vrot.slane %v366, %v381
    %v383 = vrot.slane %v375, 1
    %v384 = vsel %vm235, %v383, %v383
    %v385 = vsel %vm237, %v383, %v384
    %v386 = vsel %vm240, %v382, %v385
    %v387 = vsel %vm242, %v382, %v386
    %v388 = vsel %vm244, %v382, %v387
    %v389 = vsel %vm246, %v382, %v388
    %390 = vrot.lane.b32.xlu0 %v389, 96
    %v391 = vpop.permute.xlu0 %390
    %vm393 = vcmask 255104
    %394 = vst.msk [vmem:[#allocation2] sm:$0x3] %vm393, %v391
    %v395 = vpack.c.bf16 %v365, %v365
    %v396 = vpack.c.bf16 %v366, %v366
    %v399 = vunpack.c.l.b16 %v395
    %v400 = vunpack.c.l.b16 %v396
    %v401 = vrot.slane %v399, 1
    %v402 = vsel %vm240, %v400, %v401
    %v403 = vpack.c.b16 %v402, %v402
    %404 = vrot.lane.b32.xlu0 %v403, 80
    %v405 = vpop.permute.xlu0 %404
    %v407 = vsel %vm121, %v405, 0
    %409 = vmatprep.subr.bf16.mxu0 0
    %410 = vmatpush1.bf16.msra.mxu0 %v119
    %411 = vmatprep.subr.bf16.mxu0 0
    %412 = vmatpush1.bf16.msra.mxu0 0
    %413 = vmatprep.subr.bf16.mxu0 0
    %414 = vmatpush1.bf16.msra.mxu0 0
    %415 = vmatprep.subr.bf16.mxu0 0
    %416 = vmatpush1.bf16.msra.mxu0 0
    %417 = vmatprep.subr.bf16.mxu0 0
    %418 = vmatpush1.bf16.msra.mxu0 0
    %419 = vmatprep.subr.bf16.mxu0 0
    %420 = vmatpush1.bf16.msra.mxu0 0
    %421 = vmatprep.subr.bf16.mxu0 0
    %422 = vmatpush1.bf16.msra.mxu0 0
    %423 = vmatprep.subr.bf16.mxu0 0
    %424 = vmatpush1.bf16.msra.mxu0 0
    %425 = vmatprep.subr.bf16.mxu0 0
    %426 = vmatpush1.bf16.msra.mxu0 0
    %427 = vmatprep.subr.bf16.mxu0 0
    %428 = vmatpush1.bf16.msra.mxu0 0
    %429 = vmatprep.subr.bf16.mxu0 0
    %430 = vmatpush1.bf16.msra.mxu0 0
    %431 = vmatprep.subr.bf16.mxu0 0
    %432 = vmatpush1.bf16.msra.mxu0 0
    %433 = vmatprep.subr.bf16.mxu0 0
    %434 = vmatpush1.bf16.msra.mxu0 0
    %435 = vmatprep.subr.bf16.mxu0 0
    %436 = vmatpush1.bf16.msra.mxu0 0
    %437 = vmatprep.subr.bf16.mxu0 0
    %438 = vmatpush1.bf16.msra.mxu0 0
    %439 = vmatprep.subr.bf16.mxu0 0
    %440 = vmatpush1.bf16.msra.mxu0 0
    %441 = vmatprep.mubr.bf16.mxu0 0
    %442 = vmatmul.mubr.bf16.gmra.mrb[0].mxu0 %v407
    %v443 = vpop.f32.mrb[0].mxu0
    %v444 = vadd.f32 0.0, %v443
    %v445 = vpop.f32.mrb[0].mxu0
    %v446 = vpop.f32.mrb[0].mxu0
    %v447 = vpop.f32.mrb[0].mxu0
    %448 = vdwg.mxu0
    %v450 = vrot.slane %v444, 6
    %v451 = vrot.slane %v444, 7
    %v454 = vadd.f32 %v99, %v450
    %v455 = vadd.f32 %v107, %v451
    %v456 = vxor.u32 %v454, 2147483648
    %v457 = vxor.u32 %v455, 2147483648
    %v458 = vmul.f32 %v456, 1.442695
    %v459 = vpow.pop %v458
    %v460 = vmul.f32 %v457, 1.442695
    %v461 = vpow.pop %v460
    %v462 = vadd.f32 %v459, 1.0
    %v463 = vadd.f32 %v461, 1.0
    %v464 = vrcp.pop %v462
    %v465 = vmul.f32 1.0, %v464
    %v466 = vrcp.pop %v463
    %v467 = vmul.f32 1.0, %v466
    %v468 = vtanh.pop %v454
    %v469 = vtanh.pop %v455
    %v472 = vrot.slane %v353, 7
    %v473 = vrot.slane %v354, 7
    %v476 = vmul.f32 %v465, %v472
    %v477 = vmul.f32 %v467, %v473
    %480 = vrot.lane.b32.xlu0 %v468, 96
    %v481 = vpop.permute.xlu0 %480
    %482 = vrot.lane.b32.xlu0 %v469, 96
    %v483 = vpop.permute.xlu0 %482
    %v486 = vmul.f32 %v465, %v481
    %v487 = vmul.f32 %v467, %v483
    %490 = vrot.lane.b32.xlu0 %v486, 16
    %v491 = vpop.permute.xlu0 %490
    %492 = vrot.lane.b32.xlu0 %v487, 16
    %v493 = vpop.permute.xlu0 %492
    %v496 = vadd.f32 %v476, %v491
    %v497 = vadd.f32 %v477, %v493
    %v498 = vtanh.pop %v496
    %v499 = vtanh.pop %v497
    %502 = vrot.lane.b32.xlu0 %v498, 32
    %v503 = vpop.permute.xlu0 %502
    %504 = vrot.lane.b32.xlu0 %v499, 32
    %v505 = vpop.permute.xlu0 %504
    %v508 = vmul.f32 %v465, %v503
    %v509 = vmul.f32 %v467, %v505
    %v513 = vunpack.c.l.s4 1983009808
    %v514 = vunpack.c.0.s8 %v513
    %v515 = vlaneseq
    %v516 = vshrl.u32 %v515, 7
    %v517 = vsub.s32 %v514, %v516
    %v518 = vrot.slane %v508, %v517
    %v519 = vcombine.high %v518, %v518
    %v521 = vunpack.c.l.s4 1983009808
    %v522 = vunpack.c.0.s8 %v521
    %v523 = vlaneseq
    %v524 = vshrl.u32 %v523, 7
    %v525 = vsub.s32 %v522, %v524
    %v526 = vrot.slane %v509, %v525
    %v527 = vcombine.high %v526, %v526
    %v528 = vsel %vm235, %v519, %v519
    %v529 = vsel %vm237, %v519, %v528
    %v530 = vrot.slane %v527, 7
    %v531 = vsel %vm240, %v530, %v529
    %v532 = vsel %vm242, %v530, %v531
    %v533 = vsel %vm244, %v530, %v532
    %v534 = vsel %vm246, %v530, %v533
    %535 = vrot.lane.b32.xlu0 %v534, 112
    %v536 = vpop.permute.xlu0 %535
    %vm538 = vcmask 386304
    %539 = vst.msk [vmem:[#allocation2] sm:$0x3] %vm538, %v536
    %v540 = vpack.c.bf16 %v508, %v508
    %v541 = vpack.c.bf16 %v509, %v509
    %v544 = vunpack.c.l.b16 %v540
    %v545 = vunpack.c.l.b16 %v541
    %v546 = vrot.slane %v544, 2
    %v547 = vrot.slane %v545, 1
    %v548 = vsel %vm240, %v547, %v546
    %v549 = vpack.c.b16 %v548, %v548
    %550 = vrot.lane.b32.xlu0 %v549, 80
    %v551 = vpop.permute.xlu0 %550
    %v553 = vsel %vm121, %v551, 0
    %555 = vmatprep.subr.bf16.mxu0 0
    %556 = vmatpush1.bf16.msra.mxu0 %v119
    %557 = vmatprep.subr.bf16.mxu0 0
    %558 = vmatpush1.bf16.msra.mxu0 0
    %559 = vmatprep.subr.bf16.mxu0 0
    %560 = vmatpush1.bf16.msra.mxu0 0
    %561 = vmatprep.subr.bf16.mxu0 0
    %562 = vmatpush1.bf16.msra.mxu0 0
    %563 = vmatprep.subr.bf16.mxu0 0
    %564 = vmatpush1.bf16.msra.mxu0 0
    %565 = vmatprep.subr.bf16.mxu0 0
    %566 = vmatpush1.bf16.msra.mxu0 0
    %567 = vmatprep.subr.bf16.mxu0 0
    %568 = vmatpush1.bf16.msra.mxu0 0
    %569 = vmatprep.subr.bf16.mxu0 0
    %570 = vmatpush1.bf16.msra.mxu0 0
    %571 = vmatprep.subr.bf16.mxu0 0
    %572 = vmatpush1.bf16.msra.mxu0 0
    %573 = vmatprep.subr.bf16.mxu0 0
    %574 = vmatpush1.bf16.msra.mxu0 0
    %575 = vmatprep.subr.bf16.mxu0 0
    %576 = vmatpush1.bf16.msra.mxu0 0
    %577 = vmatprep.subr.bf16.mxu0 0
    %578 = vmatpush1.bf16.msra.mxu0 0
    %579 = vmatprep.subr.bf16.mxu0 0
    %580 = vmatpush1.bf16.msra.mxu0 0
    %581 = vmatprep.subr.bf16.mxu0 0
    %582 = vmatpush1.bf16.msra.mxu0 0
    %583 = vmatprep.subr.bf16.mxu0 0
    %584 = vmatpush1.bf16.msra.mxu0 0
    %585 = vmatprep.subr.bf16.mxu0 0
    %586 = vmatpush1.bf16.msra.mxu0 0
    %587 = vmatprep.mubr.bf16.mxu0 0
    %588 = vmatmul.mubr.bf16.gmra.mrb[0].mxu0 %v553
    %v589 = vpop.f32.mrb[0].mxu0
    %v590 = vadd.f32 0.0, %v589
    %v591 = vpop.f32.mrb[0].mxu0
    %v592 = vpop.f32.mrb[0].mxu0
    %v593 = vpop.f32.mrb[0].mxu0
    %594 = vdwg.mxu0
    %v596 = vrot.slane %v590, 5
    %v597 = vrot.slane %v590, 6
    %v600 = vadd.f32 %v99, %v596
    %v601 = vadd.f32 %v107, %v597
    %v602 = vxor.u32 %v600, 2147483648
    %v603 = vxor.u32 %v601, 2147483648
    %v604 = vmul.f32 %v602, 1.442695
    %v605 = vpow.pop %v604
    %v606 = vmul.f32 %v603, 1.442695
    %v607 = vpow.pop %v606
    %v608 = vadd.f32 %v605, 1.0
    %v609 = vadd.f32 %v607, 1.0
    %v610 = vrcp.pop %v608
    %v611 = vmul.f32 1.0, %v610
    %v612 = vrcp.pop %v609
    %v613 = vmul.f32 1.0, %v612
    %v614 = vtanh.pop %v600
    %v615 = vtanh.pop %v601
    %v618 = vrot.slane %v496, 7
    %v619 = vrot.slane %v497, 7
    %v622 = vmul.f32 %v611, %v618
    %v623 = vmul.f32 %v613, %v619
    %626 = vrot.lane.b32.xlu0 %v614, 96
    %v627 = vpop.permute.xlu0 %626
    %628 = vrot.lane.b32.xlu0 %v615, 96
    %v629 = vpop.permute.xlu0 %628
    %v632 = vmul.f32 %v611, %v627
    %v633 = vmul.f32 %v613, %v629
    %636 = vrot.lane.b32.xlu0 %v632, 16
    %v637 = vpop.permute.xlu0 %636
    %638 = vrot.lane.b32.xlu0 %v633, 16
    %v639 = vpop.permute.xlu0 %638
    %v642 = vadd.f32 %v622, %v637
    %v643 = vadd.f32 %v623, %v639
    %v644 = vtanh.pop %v642
    %v645 = vtanh.pop %v643
    %648 = vrot.lane.b32.xlu0 %v644, 32
    %v649 = vpop.permute.xlu0 %648
    %650 = vrot.lane.b32.xlu0 %v645, 32
    %v651 = vpop.permute.xlu0 %650
    %v654 = vmul.f32 %v611, %v649
    %v655 = vmul.f32 %v613, %v651
    %v659 = vunpack.c.l.s4 1983009808
    %v660 = vunpack.c.0.s8 %v659
    %v661 = vlaneseq
    %v662 = vshrl.u32 %v661, 7
    %v663 = vsub.s32 %v660, %v662
    %v664 = vrot.slane %v654, %v663
    %v665 = vcombine.high %v664, %v664
    %v667 = vunpack.c.l.s4 1983009808
    %v668 = vunpack.c.0.s8 %v667
    %v669 = vlaneseq
    %v670 = vshrl.u32 %v669, 7
    %v671 = vsub.s32 %v668, %v670
    %v672 = vrot.slane %v655, %v671
    %v673 = vcombine.high %v672, %v672
    %v674 = vrot.slane %v665, 1
    %v675 = vsel %vm235, %v674, %v674
    %v676 = vsel %vm237, %v674, %v675
    %v677 = vsel %vm240, %v673, %v676
    %v678 = vsel %vm242, %v673, %v677
    %v679 = vsel %vm244, %v673, %v678
    %v680 = vsel %vm246, %v673, %v679
    %vm682 = vcmask 517504
    %683 = vst.msk [vmem:[#allocation2] sm:$0x3] %vm682, %v680
    %v684 = vpack.c.bf16 %v654, %v654
    %v685 = vpack.c.bf16 %v655, %v655
    %v688 = vunpack.c.l.b16 %v684
    %v689 = vunpack.c.l.b16 %v685
    %v690 = vrot.slane %v688, 3
    %v691 = vrot.slane %v689, 2
    %v692 = vsel %vm240, %v691, %v690
    %v693 = vpack.c.b16 %v692, %v692
    %694 = vrot.lane.b32.xlu0 %v693, 80
    %v695 = vpop.permute.xlu0 %694
    %v697 = vsel %vm121, %v695, 0
    %699 = vmatprep.subr.bf16.mxu0 0
    %700 = vmatpush1.bf16.msra.mxu0 %v119
    %701 = vmatprep.subr.bf16.mxu0 0
    %702 = vmatpush1.bf16.msra.mxu0 0
    %703 = vmatprep.subr.bf16.mxu0 0
    %704 = vmatpush1.bf16.msra.mxu0 0
    %705 = vmatprep.subr.bf16.mxu0 0
    %706 = vmatpush1.bf16.msra.mxu0 0
    %707 = vmatprep.subr.bf16.mxu0 0
    %708 = vmatpush1.bf16.msra.mxu0 0
    %709 = vmatprep.subr.bf16.mxu0 0
    %710 = vmatpush1.bf16.msra.mxu0 0
    %711 = vmatprep.subr.bf16.mxu0 0
    %712 = vmatpush1.bf16.msra.mxu0 0
    %713 = vmatprep.subr.bf16.mxu0 0
    %714 = vmatpush1.bf16.msra.mxu0 0
    %715 = vmatprep.subr.bf16.mxu0 0
    %716 = vmatpush1.bf16.msra.mxu0 0
    %717 = vmatprep.subr.bf16.mxu0 0
    %718 = vmatpush1.bf16.msra.mxu0 0
    %719 = vmatprep.subr.bf16.mxu0 0
    %720 = vmatpush1.bf16.msra.mxu0 0
    %721 = vmatprep.subr.bf16.mxu0 0
    %722 = vmatpush1.bf16.msra.mxu0 0
    %723 = vmatprep.subr.bf16.mxu0 0
    %724 = vmatpush1.bf16.msra.mxu0 0
    %725 = vmatprep.subr.bf16.mxu0 0
    %726 = vmatpush1.bf16.msra.mxu0 0
    %727 = vmatprep.subr.bf16.mxu0 0
    %728 = vmatpush1.bf16.msra.mxu0 0
    %729 = vmatprep.subr.bf16.mxu0 0
    %730 = vmatpush1.bf16.msra.mxu0 0
    %731 = vmatprep.mubr.bf16.mxu0 0
    %732 = vmatmul.mubr.bf16.gmra.mrb[0].mxu0 %v697
    %v733 = vpop.f32.mrb[0].mxu0
    %v734 = vadd.f32 0.0, %v733
    %v735 = vpop.f32.mrb[0].mxu0
    %v736 = vpop.f32.mrb[0].mxu0
    %v737 = vpop.f32.mrb[0].mxu0
    %738 = vdwg.mxu0
    %v740 = vrot.slane %v734, 4
    %v741 = vrot.slane %v734, 5
    %v744 = vadd.f32 %v99, %v740
    %v745 = vadd.f32 %v107, %v741
    %v746 = vxor.u32 %v744, 2147483648
    %v747 = vxor.u32 %v745, 2147483648
    %v748 = vmul.f32 %v746, 1.442695
    %v749 = vpow.pop %v748
    %v750 = vmul.f32 %v747, 1.442695
    %v751 = vpow.pop %v750
    %v752 = vadd.f32 %v749, 1.0
    %v753 = vadd.f32 %v751, 1.0
    %v754 = vrcp.pop %v752
    %v755 = vmul.f32 1.0, %v754
    %v756 = vrcp.pop %v753
    %v757 = vmul.f32 1.0, %v756
    %v758 = vtanh.pop %v744
    %v759 = vtanh.pop %v745
    %v762 = vrot.slane %v642, 7
    %v763 = vrot.slane %v643, 7
    %v766 = vmul.f32 %v755, %v762
    %v767 = vmul.f32 %v757, %v763
    %770 = vrot.lane.b32.xlu0 %v758, 96
    %v771 = vpop.permute.xlu0 %770
    %772 = vrot.lane.b32.xlu0 %v759, 96
    %v773 = vpop.permute.xlu0 %772
    %v776 = vmul.f32 %v755, %v771
    %v777 = vmul.f32 %v757, %v773
    %780 = vrot.lane.b32.xlu0 %v776, 16
    %v781 = vpop.permute.xlu0 %780
    %782 = vrot.lane.b32.xlu0 %v777, 16
    %v783 = vpop.permute.xlu0 %782
    %v786 = vadd.f32 %v766, %v781
    %v787 = vadd.f32 %v767, %v783
    %v788 = vtanh.pop %v786
    %v789 = vtanh.pop %v787
    %792 = vrot.lane.b32.xlu0 %v788, 32
    %v793 = vpop.permute.xlu0 %792
    %794 = vrot.lane.b32.xlu0 %v789, 32
    %v795 = vpop.permute.xlu0 %794
    %v798 = vmul.f32 %v755, %v793
    %v799 = vmul.f32 %v757, %v795
    %v802 = vcombine.high %v798, %v798
    %v804 = vunpack.c.l.s4 1983009808
    %v805 = vunpack.c.0.s8 %v804
    %v806 = vlaneseq
    %v807 = vshrl.u32 %v806, 7
    %v808 = vsub.s32 %v805, %v807
    %v809 = vrot.slane %v802, %v808
    %v810 = vcombine.high %v799, %v799
    %v812 = vunpack.c.l.s4 1983009808
    %v813 = vunpack.c.0.s8 %v812
    %v814 = vlaneseq
    %v815 = vshrl.u32 %v814, 7
    %v816 = vsub.s32 %v813, %v815
    %v817 = vrot.slane %v810, %v816
    %v818 = vsel %vm235, %v809, %v809
    %v819 = vsel %vm237, %v809, %v818
    %v820 = vrot.slane %v817, 7
    %v821 = vsel %vm240, %v820, %v819
    %v822 = vsel %vm242, %v820, %v821
    %v823 = vsel %vm244, %v820, %v822
    %v824 = vsel %vm246, %v820, %v823
    %825 = vrot.lane.b32.xlu0 %v824, 16
    %v826 = vpop.permute.xlu0 %825
    %vm828 = vcmask 648704
    %829 = vst.msk [vmem:[#allocation2] sm:$0x3] %vm828, %v826
    %v830 = vpack.c.bf16 %v798, %v798
    %v831 = vpack.c.bf16 %v799, %v799
    %v834 = vunpack.c.l.b16 %v830
    %v835 = vunpack.c.l.b16 %v831
    %v836 = vrot.slane %v834, 4
    %v837 = vrot.slane %v835, 3
    %v838 = vsel %vm240, %v837, %v836
    %v839 = vpack.c.b16 %v838, %v838
    %840 = vrot.lane.b32.xlu0 %v839, 80
    %v841 = vpop.permute.xlu0 %840
    %v843 = vsel %vm121, %v841, 0
    %845 = vmatprep.subr.bf16.mxu0 0
    %846 = vmatpush1.bf16.msra.mxu0 %v119
    %847 = vmatprep.subr.bf16.mxu0 0
    %848 = vmatpush1.bf16.msra.mxu0 0
    %849 = vmatprep.subr.bf16.mxu0 0
    %850 = vmatpush1.bf16.msra.mxu0 0
    %851 = vmatprep.subr.bf16.mxu0 0
    %852 = vmatpush1.bf16.msra.mxu0 0
    %853 = vmatprep.subr.bf16.mxu0 0
    %854 = vmatpush1.bf16.msra.mxu0 0
    %855 = vmatprep.subr.bf16.mxu0 0
    %856 = vmatpush1.bf16.msra.mxu0 0
    %857 = vmatprep.subr.bf16.mxu0 0
    %858 = vmatpush1.bf16.msra.mxu0 0
    %859 = vmatprep.subr.bf16.mxu0 0
    %860 = vmatpush1.bf16.msra.mxu0 0
    %861 = vmatprep.subr.bf16.mxu0 0
    %862 = vmatpush1.bf16.msra.mxu0 0
    %863 = vmatprep.subr.bf16.mxu0 0
    %864 = vmatpush1.bf16.msra.mxu0 0
    %865 = vmatprep.subr.bf16.mxu0 0
    %866 = vmatpush1.bf16.msra.mxu0 0
    %867 = vmatprep.subr.bf16.mxu0 0
    %868 = vmatpush1.bf16.msra.mxu0 0
    %869 = vmatprep.subr.bf16.mxu0 0
    %870 = vmatpush1.bf16.msra.mxu0 0
    %871 = vmatprep.subr.bf16.mxu0 0
    %872 = vmatpush1.bf16.msra.mxu0 0
    %873 = vmatprep.subr.bf16.mxu0 0
    %874 = vmatpush1.bf16.msra.mxu0 0
    %875 = vmatprep.subr.bf16.mxu0 0
    %876 = vmatpush1.bf16.msra.mxu0 0
    %877 = vmatprep.mubr.bf16.mxu0 0
    %878 = vmatmul.mubr.bf16.gmra.mrb[0].mxu0 %v843
    %v879 = vpop.f32.mrb[0].mxu0
    %v880 = vadd.f32 0.0, %v879
    %v881 = vpop.f32.mrb[0].mxu0
    %v882 = vpop.f32.mrb[0].mxu0
    %v883 = vpop.f32.mrb[0].mxu0
    %884 = vdwg.mxu0
    %v886 = vrot.slane %v880, 3
    %v887 = vrot.slane %v880, 4
    %v890 = vadd.f32 %v99, %v886
    %v891 = vadd.f32 %v107, %v887
    %v892 = vxor.u32 %v890, 2147483648
    %v893 = vxor.u32 %v891, 2147483648
    %v894 = vmul.f32 %v892, 1.442695
    %v895 = vpow.pop %v894
    %v896 = vmul.f32 %v893, 1.442695
    %v897 = vpow.pop %v896
    %v898 = vadd.f32 %v895, 1.0
    %v899 = vadd.f32 %v897, 1.0
    %v900 = vrcp.pop %v898
    %v901 = vmul.f32 1.0, %v900
    %v902 = vrcp.pop %v899
    %v903 = vmul.f32 1.0, %v902
    %v904 = vtanh.pop %v890
    %v905 = vtanh.pop %v891
    %v908 = vrot.slane %v786, 7
    %v909 = vrot.slane %v787, 7
    %v912 = vmul.f32 %v901, %v908
    %v913 = vmul.f32 %v903, %v909
    %916 = vrot.lane.b32.xlu0 %v904, 96
    %v917 = vpop.permute.xlu0 %916
    %918 = vrot.lane.b32.xlu0 %v905, 96
    %v919 = vpop.permute.xlu0 %918
    %v922 = vmul.f32 %v901, %v917
    %v923 = vmul.f32 %v903, %v919
    %926 = vrot.lane.b32.xlu0 %v922, 16
    %v927 = vpop.permute.xlu0 %926
    %928 = vrot.lane.b32.xlu0 %v923, 16
    %v929 = vpop.permute.xlu0 %928
    %v932 = vadd.f32 %v912, %v927
    %v933 = vadd.f32 %v913, %v929
    %v934 = vtanh.pop %v932
    %v935 = vtanh.pop %v933
    %938 = vrot.lane.b32.xlu0 %v934, 32
    %v939 = vpop.permute.xlu0 %938
    %940 = vrot.lane.b32.xlu0 %v935, 32
    %v941 = vpop.permute.xlu0 %940
    %v944 = vmul.f32 %v901, %v939
    %v945 = vmul.f32 %v903, %v941
    %v948 = vcombine.high %v944, %v944
    %v950 = vunpack.c.l.s4 1983009808
    %v951 = vunpack.c.0.s8 %v950
    %v952 = vlaneseq
    %v953 = vshrl.u32 %v952, 7
    %v954 = vsub.s32 %v951, %v953
    %v955 = vrot.slane %v948, %v954
    %v956 = vcombine.high %v945, %v945
    %v958 = vunpack.c.l.s4 1983009808
    %v959 = vunpack.c.0.s8 %v958
    %v960 = vlaneseq
    %v961 = vshrl.u32 %v960, 7
    %v962 = vsub.s32 %v959, %v961
    %v963 = vrot.slane %v956, %v962
    %v964 = vrot.slane %v955, 1
    %v965 = vsel %vm235, %v964, %v964
    %v966 = vsel %vm237, %v964, %v965
    %v967 = vsel %vm240, %v963, %v966
    %v968 = vsel %vm242, %v963, %v967
    %v969 = vsel %vm244, %v963, %v968
    %v970 = vsel %vm246, %v963, %v969
    %971 = vrot.lane.b32.xlu0 %v970, 32
    %v972 = vpop.permute.xlu0 %971
    %vm974 = vcmask 779904
    %975 = vst.msk [vmem:[#allocation2] sm:$0x3] %vm974, %v972
    %v976 = vpack.c.bf16 %v944, %v944
    %v977 = vpack.c.bf16 %v945, %v945
    %v980 = vunpack.c.l.b16 %v976
    %v981 = vunpack.c.l.b16 %v977
    %v982 = vrot.slane %v980, 5
    %v983 = vrot.slane %v981, 4
    %v984 = vsel %vm240, %v983, %v982
    %v985 = vpack.c.b16 %v984, %v984
    %986 = vrot.lane.b32.xlu0 %v985, 80
    %v987 = vpop.permute.xlu0 %986
    %v989 = vsel %vm121, %v987, 0
    %991 = vmatprep.subr.bf16.mxu0 0
    %992 = vmatpush1.bf16.msra.mxu0 %v119
    %993 = vmatprep.subr.bf16.mxu0 0
    %994 = vmatpush1.bf16.msra.mxu0 0
    %995 = vmatprep.subr.bf16.mxu0 0
    %996 = vmatpush1.bf16.msra.mxu0 0
    %997 = vmatprep.subr.bf16.mxu0 0
    %998 = vmatpush1.bf16.msra.mxu0 0
    %999 = vmatprep.subr.bf16.mxu0 0
    %1000 = vmatpush1.bf16.msra.mxu0 0
    %1001 = vmatprep.subr.bf16.mxu0 0
    %1002 = vmatpush1.bf16.msra.mxu0 0
    %1003 = vmatprep.subr.bf16.mxu0 0
    %1004 = vmatpush1.bf16.msra.mxu0 0
    %1005 = vmatprep.subr.bf16.mxu0 0
    %1006 = vmatpush1.bf16.msra.mxu0 0
    %1007 = vmatprep.subr.bf16.mxu0 0
    %1008 = vmatpush1.bf16.msra.mxu0 0
    %1009 = vmatprep.subr.bf16.mxu0 0
    %1010 = vmatpush1.bf16.msra.mxu0 0
    %1011 = vmatprep.subr.bf16.mxu0 0
    %1012 = vmatpush1.bf16.msra.mxu0 0
    %1013 = vmatprep.subr.bf16.mxu0 0
    %1014 = vmatpush1.bf16.msra.mxu0 0
    %1015 = vmatprep.subr.bf16.mxu0 0
    %1016 = vmatpush1.bf16.msra.mxu0 0
    %1017 = vmatprep.subr.bf16.mxu0 0
    %1018 = vmatpush1.bf16.msra.mxu0 0
    %1019 = vmatprep.subr.bf16.mxu0 0
    %1020 = vmatpush1.bf16.msra.mxu0 0
    %1021 = vmatprep.subr.bf16.mxu0 0
    %1022 = vmatpush1.bf16.msra.mxu0 0
    %1023 = vmatprep.mubr.bf16.mxu0 0
    %1024 = vmatmul.mubr.bf16.gmra.mrb[0].mxu0 %v989
    %v1025 = vpop.f32.mrb[0].mxu0
    %v1026 = vadd.f32 0.0, %v1025
    %v1027 = vpop.f32.mrb[0].mxu0
    %v1028 = vpop.f32.mrb[0].mxu0
    %v1029 = vpop.f32.mrb[0].mxu0
    %1030 = vdwg.mxu0
    %v1032 = vrot.slane %v1026, 2
    %v1033 = vrot.slane %v1026, 3
    %v1036 = vadd.f32 %v99, %v1032
    %v1037 = vadd.f32 %v107, %v1033
    %v1038 = vxor.u32 %v1036, 2147483648
    %v1039 = vxor.u32 %v1037, 2147483648
    %v1040 = vmul.f32 %v1038, 1.442695
    %v1041 = vpow.pop %v1040
    %v1042 = vmul.f32 %v1039, 1.442695
    %v1043 = vpow.pop %v1042
    %v1044 = vadd.f32 %v1041, 1.0
    %v1045 = vadd.f32 %v1043, 1.0
    %v1046 = vrcp.pop %v1044
    %v1047 = vmul.f32 1.0, %v1046
    %v1048 = vrcp.pop %v1045
    %v1049 = vmul.f32 1.0, %v1048
    %v1050 = vtanh.pop %v1036
    %v1051 = vtanh.pop %v1037
    %v1054 = vrot.slane %v932, 7
    %v1055 = vrot.slane %v933, 7
    %v1058 = vmul.f32 %v1047, %v1054
    %v1059 = vmul.f32 %v1049, %v1055
    %1062 = vrot.lane.b32.xlu0 %v1050, 96
    %v1063 = vpop.permute.xlu0 %1062
    %1064 = vrot.lane.b32.xlu0 %v1051, 96
    %v1065 = vpop.permute.xlu0 %1064
    %v1068 = vmul.f32 %v1047, %v1063
    %v1069 = vmul.f32 %v1049, %v1065
    %1072 = vrot.lane.b32.xlu0 %v1068, 16
    %v1073 = vpop.permute.xlu0 %1072
    %1074 = vrot.lane.b32.xlu0 %v1069, 16
    %v1075 = vpop.permute.xlu0 %1074
    %v1078 = vadd.f32 %v1058, %v1073
    %v1079 = vadd.f32 %v1059, %v1075
    %v1080 = vtanh.pop %v1078
    %v1081 = vtanh.pop %v1079
    %1084 = vrot.lane.b32.xlu0 %v1080, 32
    %v1085 = vpop.permute.xlu0 %1084
    %1086 = vrot.lane.b32.xlu0 %v1081, 32
    %v1087 = vpop.permute.xlu0 %1086
    %v1090 = vmul.f32 %v1047, %v1085
    %v1091 = vmul.f32 %v1049, %v1087
    %v1094 = vcombine.high %v1090, %v1090
    %v1096 = vunpack.c.l.s4 1983009808
    %v1097 = vunpack.c.0.s8 %v1096
    %v1098 = vlaneseq
    %v1099 = vshrl.u32 %v1098, 7
    %v1100 = vsub.s32 %v1097, %v1099
    %v1101 = vrot.slane %v1094, %v1100
    %v1102 = vcombine.high %v1101, %v1101
    %v1103 = vcombine.high %v1091, %v1091
    %v1105 = vunpack.c.l.s4 1983009808
    %v1106 = vunpack.c.0.s8 %v1105
    %v1107 = vlaneseq
    %v1108 = vshrl.u32 %v1107, 7
    %v1109 = vsub.s32 %v1106, %v1108
    %v1110 = vrot.slane %v1103, %v1109
    %v1111 = vcombine.high %v1110, %v1110
    %v1112 = vsel %vm235, %v1102, %v1102
    %v1113 = vsel %vm237, %v1102, %v1112
    %v1114 = vrot.slane %v1111, 7
    %v1115 = vsel %vm240, %v1114, %v1113
    %v1116 = vsel %vm242, %v1114, %v1115
    %v1117 = vsel %vm244, %v1114, %v1116
    %v1118 = vsel %vm246, %v1114, %v1117
    %1119 = vrot.lane.b32.xlu0 %v1118, 48
    %v1120 = vpop.permute.xlu0 %1119
    %vm1122 = vcmask 911104
    %1123 = vst.msk [vmem:[#allocation2] sm:$0x3] %vm1122, %v1120
    %v1124 = vpack.c.bf16 %v1090, %v1090
    %v1125 = vpack.c.bf16 %v1091, %v1091
    %v1128 = vunpack.c.l.b16 %v1124
    %v1129 = vunpack.c.l.b16 %v1125
    %v1130 = vrot.slane %v1128, 6
    %v1131 = vrot.slane %v1129, 5
    %v1132 = vsel %vm240, %v1131, %v1130
    %v1133 = vpack.c.b16 %v1132, %v1132
    %1134 = vrot.lane.b32.xlu0 %v1133, 80
    %v1135 = vpop.permute.xlu0 %1134
    %v1137 = vsel %vm121, %v1135, 0
    %1139 = vmatprep.subr.bf16.mxu0 0
    %1140 = vmatpush1.bf16.msra.mxu0 %v119
    %1141 = vmatprep.subr.bf16.mxu0 0
    %1142 = vmatpush1.bf16.msra.mxu0 0
    %1143 = vmatprep.subr.bf16.mxu0 0
    %1144 = vmatpush1.bf16.msra.mxu0 0
    %1145 = vmatprep.subr.bf16.mxu0 0
    %1146 = vmatpush1.bf16.msra.mxu0 0
    %1147 = vmatprep.subr.bf16.mxu0 0
    %1148 = vmatpush1.bf16.msra.mxu0 0
    %1149 = vmatprep.subr.bf16.mxu0 0
    %1150 = vmatpush1.bf16.msra.mxu0 0
    %1151 = vmatprep.subr.bf16.mxu0 0
    %1152 = vmatpush1.bf16.msra.mxu0 0
    %1153 = vmatprep.subr.bf16.mxu0 0
    %1154 = vmatpush1.bf16.msra.mxu0 0
    %1155 = vmatprep.subr.bf16.mxu0 0
    %1156 = vmatpush1.bf16.msra.mxu0 0
    %1157 = vmatprep.subr.bf16.mxu0 0
    %1158 = vmatpush1.bf16.msra.mxu0 0
    %1159 = vmatprep.subr.bf16.mxu0 0
    %1160 = vmatpush1.bf16.msra.mxu0 0
    %1161 = vmatprep.subr.bf16.mxu0 0
    %1162 = vmatpush1.bf16.msra.mxu0 0
    %1163 = vmatprep.subr.bf16.mxu0 0
    %1164 = vmatpush1.bf16.msra.mxu0 0
    %1165 = vmatprep.subr.bf16.mxu0 0
    %1166 = vmatpush1.bf16.msra.mxu0 0
    %1167 = vmatprep.subr.bf16.mxu0 0
    %1168 = vmatpush1.bf16.msra.mxu0 0
    %1169 = vmatprep.subr.bf16.mxu0 0
    %1170 = vmatpush1.bf16.msra.mxu0 0
    %1171 = vmatprep.mubr.bf16.mxu0 0
    %1172 = vmatmul.mubr.bf16.gmra.mrb[0].mxu0 %v1137
    %v1173 = vpop.f32.mrb[0].mxu0
    %v1174 = vadd.f32 0.0, %v1173
    %v1175 = vpop.f32.mrb[0].mxu0
    %v1176 = vpop.f32.mrb[0].mxu0
    %v1177 = vpop.f32.mrb[0].mxu0
    %1178 = vdwg.mxu0
    %v1180 = vrot.slane %v1174, 1
    %v1181 = vrot.slane %v1174, 2
    %v1184 = vadd.f32 %v99, %v1180
    %v1185 = vadd.f32 %v107, %v1181
    %v1186 = vxor.u32 %v1184, 2147483648
    %v1187 = vxor.u32 %v1185, 2147483648
    %v1188 = vmul.f32 %v1186, 1.442695
    %v1189 = vpow.pop %v1188
    %v1190 = vmul.f32 %v1187, 1.442695
    %v1191 = vpow.pop %v1190
    %v1192 = vadd.f32 %v1189, 1.0
    %v1193 = vadd.f32 %v1191, 1.0
    %v1194 = vrcp.pop %v1192
    %v1195 = vmul.f32 1.0, %v1194
    %v1196 = vrcp.pop %v1193
    %v1197 = vmul.f32 1.0, %v1196
    %v1198 = vtanh.pop %v1184
    %v1199 = vtanh.pop %v1185
    %v1202 = vrot.slane %v1078, 7
    %v1203 = vrot.slane %v1079, 7
    %v1206 = vmul.f32 %v1195, %v1202
    %v1207 = vmul.f32 %v1197, %v1203
    %1210 = vrot.lane.b32.xlu0 %v1198, 96
    %v1211 = vpop.permute.xlu0 %1210
    %1212 = vrot.lane.b32.xlu0 %v1199, 96
    %v1213 = vpop.permute.xlu0 %1212
    %v1216 = vmul.f32 %v1195, %v1211
    %v1217 = vmul.f32 %v1197, %v1213
    %1220 = vrot.lane.b32.xlu0 %v1216, 16
    %v1221 = vpop.permute.xlu0 %1220
    %1222 = vrot.lane.b32.xlu0 %v1217, 16
    %v1223 = vpop.permute.xlu0 %1222
    %v1226 = vadd.f32 %v1206, %v1221
    %v1227 = vadd.f32 %v1207, %v1223
    %v1228 = vtanh.pop %v1226
    %v1229 = vtanh.pop %v1227
    %1232 = vrot.lane.b32.xlu0 %v1228, 32
    %v1233 = vpop.permute.xlu0 %1232
    %1234 = vrot.lane.b32.xlu0 %v1229, 32
    %v1235 = vpop.permute.xlu0 %1234
    %v1238 = vmul.f32 %v1195, %v1233
    %v1239 = vmul.f32 %v1197, %v1235
    %v1242 = vcombine.high %v1238, %v1238
    %v1244 = vunpack.c.l.s4 1983009808
    %v1245 = vunpack.c.0.s8 %v1244
    %v1246 = vlaneseq
    %v1247 = vshrl.u32 %v1246, 7
    %v1248 = vsub.s32 %v1245, %v1247
    %v1249 = vrot.slane %v1242, %v1248
    %v1250 = vcombine.high %v1249, %v1249
    %v1251 = vcombine.high %v1239, %v1239
    %v1253 = vunpack.c.l.s4 1983009808
    %v1254 = vunpack.c.0.s8 %v1253
    %v1255 = vlaneseq
    %v1256 = vshrl.u32 %v1255, 7
    %v1257 = vsub.s32 %v1254, %v1256
    %v1258 = vrot.slane %v1251, %v1257
    %v1259 = vcombine.high %v1258, %v1258
    %v1260 = vrot.slane %v1250, 1
    %v1261 = vsel %vm235, %v1260, %v1260
    %v1262 = vsel %vm237, %v1260, %v1261
    %v1263 = vsel %vm240, %v1259, %v1262
    %v1264 = vsel %vm242, %v1259, %v1263
    %v1265 = vsel %vm244, %v1259, %v1264
    %v1266 = vsel %vm246, %v1259, %v1265
    %1267 = vrot.lane.b32.xlu0 %v1266, 64
    %v1268 = vpop.permute.xlu0 %1267
    %vm1270 = vcmask 1042304
    %1271 = vst.msk [vmem:[#allocation2] sm:$0x3] %vm1270, %v1268
    %v1272 = vpack.c.bf16 %v1238, %v1238
    %v1273 = vpack.c.bf16 %v1239, %v1239
    %v1276 = vunpack.c.l.b16 %v1272
    %v1277 = vunpack.c.l.b16 %v1273
    %v1278 = vrot.slane %v1276, 7
    %v1279 = vrot.slane %v1277, 6
    %v1280 = vsel %vm240, %v1279, %v1278
    %v1281 = vpack.c.b16 %v1280, %v1280
    %1282 = vrot.lane.b32.xlu0 %v1281, 80
    %v1283 = vpop.permute.xlu0 %1282
    %v1285 = vsel %vm121, %v1283, 0
    %1287 = vmatprep.subr.bf16.mxu0 0
    %1288 = vmatpush1.bf16.msra.mxu0 %v119
    %1289 = vmatprep.subr.bf16.mxu0 0
    %1290 = vmatpush1.bf16.msra.mxu0 0
    %1291 = vmatprep.subr.bf16.mxu0 0
    %1292 = vmatpush1.bf16.msra.mxu0 0
    %1293 = vmatprep.subr.bf16.mxu0 0
    %1294 = vmatpush1.bf16.msra.mxu0 0
    %1295 = vmatprep.subr.bf16.mxu0 0
    %1296 = vmatpush1.bf16.msra.mxu0 0
    %1297 = vmatprep.subr.bf16.mxu0 0
    %1298 = vmatpush1.bf16.msra.mxu0 0
    %1299 = vmatprep.subr.bf16.mxu0 0
    %1300 = vmatpush1.bf16.msra.mxu0 0
    %1301 = vmatprep.subr.bf16.mxu0 0
    %1302 = vmatpush1.bf16.msra.mxu0 0
    %1303 = vmatprep.subr.bf16.mxu0 0
    %1304 = vmatpush1.bf16.msra.mxu0 0
    %1305 = vmatprep.subr.bf16.mxu0 0
    %1306 = vmatpush1.bf16.msra.mxu0 0
    %1307 = vmatprep.subr.bf16.mxu0 0
    %1308 = vmatpush1.bf16.msra.mxu0 0
    %1309 = vmatprep.subr.bf16.mxu0 0
    %1310 = vmatpush1.bf16.msra.mxu0 0
    %1311 = vmatprep.subr.bf16.mxu0 0
    %1312 = vmatpush1.bf16.msra.mxu0 0
    %1313 = vmatprep.subr.bf16.mxu0 0
    %1314 = vmatpush1.bf16.msra.mxu0 0
    %1315 = vmatprep.subr.bf16.mxu0 0
    %1316 = vmatpush1.bf16.msra.mxu0 0
    %1317 = vmatprep.subr.bf16.mxu0 0
    %1318 = vmatpush1.bf16.msra.mxu0 0
    %1319 = vmatprep.mubr.bf16.mxu0 0
    %1320 = vmatmul.mubr.bf16.gmra.mrb[0].mxu0 %v1285
    %v1321 = vpop.f32.mrb[0].mxu0
    %v1322 = vadd.f32 0.0, %v1321
    %v1323 = vpop.f32.mrb[0].mxu0
    %v1324 = vpop.f32.mrb[0].mxu0
    %v1325 = vpop.f32.mrb[0].mxu0
    %1326 = vdwg.mxu0
    %v1328 = vrot.slane %v1322, 1
    %v1331 = vadd.f32 %v102, %v1322
    %v1332 = vadd.f32 %v110, %v1328
    %v1333 = vxor.u32 %v1331, 2147483648
    %v1334 = vxor.u32 %v1332, 2147483648
    %v1335 = vmul.f32 %v1333, 1.442695
    %v1336 = vpow.pop %v1335
    %v1337 = vmul.f32 %v1334, 1.442695
    %v1338 = vpow.pop %v1337
    %v1339 = vadd.f32 %v1336, 1.0
    %v1340 = vadd.f32 %v1338, 1.0
    %v1341 = vrcp.pop %v1339
    %v1342 = vmul.f32 1.0, %v1341
    %v1343 = vrcp.pop %v1340
    %v1344 = vmul.f32 1.0, %v1343
    %v1345 = vtanh.pop %v1331
    %v1346 = vtanh.pop %v1332
    %v1349 = vrot.slane %v1226, 7
    %v1350 = vrot.slane %v1227, 7
    %v1353 = vmul.f32 %v1342, %v1349
    %v1354 = vmul.f32 %v1344, %v1350
    %1357 = vrot.lane.b32.xlu0 %v1345, 96
    %v1358 = vpop.permute.xlu0 %1357
    %1359 = vrot.lane.b32.xlu0 %v1346, 96
    %v1360 = vpop.permute.xlu0 %1359
    %v1363 = vmul.f32 %v1342, %v1358
    %v1364 = vmul.f32 %v1344, %v1360
    %1367 = vrot.lane.b32.xlu0 %v1363, 16
    %v1368 = vpop.permute.xlu0 %1367
    %1369 = vrot.lane.b32.xlu0 %v1364, 16
    %v1370 = vpop.permute.xlu0 %1369
    %v1373 = vadd.f32 %v1353, %v1368
    %v1374 = vadd.f32 %v1354, %v1370
    %v1375 = vtanh.pop %v1373
    %v1376 = vtanh.pop %v1374
    %1379 = vrot.lane.b32.xlu0 %v1375, 32
    %v1380 = vpop.permute.xlu0 %1379
    %1381 = vrot.lane.b32.xlu0 %v1376, 32
    %v1382 = vpop.permute.xlu0 %1381
    %v1385 = vmul.f32 %v1342, %v1380
    %v1386 = vmul.f32 %v1344, %v1382
    %v1390 = vunpack.c.l.s4 1983009808
    %v1391 = vunpack.c.0.s8 %v1390
    %v1392 = vlaneseq
    %v1393 = vshrl.u32 %v1392, 7
    %v1394 = vsub.s32 %v1391, %v1393
    %v1395 = vrot.slane %v1385, %v1394
    %v1397 = vunpack.c.l.s4 1983009808
    %v1398 = vunpack.c.0.s8 %v1397
    %v1399 = vlaneseq
    %v1400 = vshrl.u32 %v1399, 7
    %v1401 = vsub.s32 %v1398, %v1400
    %v1402 = vrot.slane %v1386, %v1401
    %v1403 = vsel %vm235, %v1395, %v1395
    %v1404 = vsel %vm237, %v1395, %v1403
    %v1405 = vrot.slane %v1402, 7
    %v1406 = vsel %vm240, %v1405, %v1404
    %v1407 = vsel %vm242, %v1405, %v1406
    %v1408 = vsel %vm244, %v1405, %v1407
    %v1409 = vsel %vm246, %v1405, %v1408
    %1410 = vrot.lane.b32.xlu0 %v1409, 80
    %v1411 = vpop.permute.xlu0 %1410
    %1413 = vst.msk [vmem:[#allocation2 + $0x2] sm:$0x3] %vm251, %v1411
    %v1414 = vpack.c.bf16 %v1385, %v1385
    %v1415 = vpack.c.bf16 %v1386, %v1386
    %v1418 = vunpack.c.l.b16 %v1414
    %v1419 = vunpack.c.l.b16 %v1415
    %v1420 = vrot.slane %v1419, 7
    %v1421 = vsel %vm240, %v1420, %v1418
    %v1422 = vpack.c.b16 %v1421, %v1421
    %1423 = vrot.lane.b32.xlu0 %v1422, 80
    %v1424 = vpop.permute.xlu0 %1423
    %v1426 = vsel %vm121, %v1424, 0
    %1428 = vmatprep.subr.bf16.mxu0 0
    %1429 = vmatpush1.bf16.msra.mxu0 %v119
    %1430 = vmatprep.subr.bf16.mxu0 0
    %1431 = vmatpush1.bf16.msra.mxu0 0
    %1432 = vmatprep.subr.bf16.mxu0 0
    %1433 = vmatpush1.bf16.msra.mxu0 0
    %1434 = vmatprep.subr.bf16.mxu0 0
    %1435 = vmatpush1.bf16.msra.mxu0 0
    %1436 = vmatprep.subr.bf16.mxu0 0
    %1437 = vmatpush1.bf16.msra.mxu0 0
    %1438 = vmatprep.subr.bf16.mxu0 0
    %1439 = vmatpush1.bf16.msra.mxu0 0
    %1440 = vmatprep.subr.bf16.mxu0 0
    %1441 = vmatpush1.bf16.msra.mxu0 0
    %1442 = vmatprep.subr.bf16.mxu0 0
    %1443 = vmatpush1.bf16.msra.mxu0 0
    %1444 = vmatprep.subr.bf16.mxu0 0
    %1445 = vmatpush1.bf16.msra.mxu0 0
    %1446 = vmatprep.subr.bf16.mxu0 0
    %1447 = vmatpush1.bf16.msra.mxu0 0
    %1448 = vmatprep.subr.bf16.mxu0 0
    %1449 = vmatpush1.bf16.msra.mxu0 0
    %1450 = vmatprep.subr.bf16.mxu0 0
    %1451 = vmatpush1.bf16.msra.mxu0 0
    %1452 = vmatprep.subr.bf16.mxu0 0
    %1453 = vmatpush1.bf16.msra.mxu0 0
    %1454 = vmatprep.subr.bf16.mxu0 0
    %1455 = vmatpush1.bf16.msra.mxu0 0
    %1456 = vmatprep.subr.bf16.mxu0 0
    %1457 = vmatpush1.bf16.msra.mxu0 0
    %1458 = vmatprep.subr.bf16.mxu0 0
    %1459 = vmatpush1.bf16.msra.mxu0 0
    %1460 = vmatprep.mubr.bf16.mxu0 0
    %1461 = vmatmul.mubr.bf16.gmra.mrb[0].mxu0 %v1426
    %v1462 = vpop.f32.mrb[0].mxu0
    %v1463 = vadd.f32 0.0, %v1462
    %v1464 = vpop.f32.mrb[0].mxu0
    %v1465 = vpop.f32.mrb[0].mxu0
    %v1466 = vpop.f32.mrb[0].mxu0
    %1467 = vdwg.mxu0
    %v1469 = vrot.slane %v1463, 7
    %v1472 = vadd.f32 %v102, %v1469
    %v1473 = vadd.f32 %v110, %v1463
    %v1474 = vxor.u32 %v1472, 2147483648
    %v1475 = vxor.u32 %v1473, 2147483648
    %v1476 = vmul.f32 %v1474, 1.442695
    %v1477 = vpow.pop %v1476
    %v1478 = vmul.f32 %v1475, 1.442695
    %v1479 = vpow.pop %v1478
    %v1480 = vadd.f32 %v1477, 1.0
    %v1481 = vadd.f32 %v1479, 1.0
    %v1482 = vrcp.pop %v1480
    %v1483 = vmul.f32 1.0, %v1482
    %v1484 = vrcp.pop %v1481
    %v1485 = vmul.f32 1.0, %v1484
    %v1486 = vtanh.pop %v1472
    %v1487 = vtanh.pop %v1473
    %v1490 = vrot.slane %v1373, 7
    %v1491 = vrot.slane %v1374, 7
    %v1494 = vmul.f32 %v1483, %v1490
    %v1495 = vmul.f32 %v1485, %v1491
    %1498 = vrot.lane.b32.xlu0 %v1486, 96
    %v1499 = vpop.permute.xlu0 %1498
    %1500 = vrot.lane.b32.xlu0 %v1487, 96
    %v1501 = vpop.permute.xlu0 %1500
    %v1504 = vmul.f32 %v1483, %v1499
    %v1505 = vmul.f32 %v1485, %v1501
    %1508 = vrot.lane.b32.xlu0 %v1504, 16
    %v1509 = vpop.permute.xlu0 %1508
    %1510 = vrot.lane.b32.xlu0 %v1505, 16
    %v1511 = vpop.permute.xlu0 %1510
    %v1514 = vadd.f32 %v1494, %v1509
    %v1515 = vadd.f32 %v1495, %v1511
    %v1516 = vtanh.pop %v1514
    %v1517 = vtanh.pop %v1515
    %1520 = vrot.lane.b32.xlu0 %v1516, 32
    %v1521 = vpop.permute.xlu0 %1520
    %1522 = vrot.lane.b32.xlu0 %v1517, 32
    %v1523 = vpop.permute.xlu0 %1522
    %v1526 = vmul.f32 %v1483, %v1521
    %v1527 = vmul.f32 %v1485, %v1523
    %v1531 = vunpack.c.l.s4 1983009808
    %v1532 = vunpack.c.0.s8 %v1531
    %v1533 = vlaneseq
    %v1534 = vshrl.u32 %v1533, 7
    %v1535 = vsub.s32 %v1532, %v1534
    %v1536 = vrot.slane %v1526, %v1535
    %v1538 = vunpack.c.l.s4 1983009808
    %v1539 = vunpack.c.0.s8 %v1538
    %v1540 = vlaneseq
    %v1541 = vshrl.u32 %v1540, 7
    %v1542 = vsub.s32 %v1539, %v1541
    %v1543 = vrot.slane %v1527, %v1542
    %v1544 = vrot.slane %v1536, 1
    %v1545 = vsel %vm235, %v1544, %v1544
    %v1546 = vsel %vm237, %v1544, %v1545
    %v1547 = vsel %vm240, %v1543, %v1546
    %v1548 = vsel %vm242, %v1543, %v1547
    %v1549 = vsel %vm244, %v1543, %v1548
    %v1550 = vsel %vm246, %v1543, %v1549
    %1551 = vrot.lane.b32.xlu0 %v1550, 96
    %v1552 = vpop.permute.xlu0 %1551
    %1554 = vst.msk [vmem:[#allocation2 + $0x2] sm:$0x3] %vm393, %v1552
    %v1555 = vpack.c.bf16 %v1526, %v1526
    %v1556 = vpack.c.bf16 %v1527, %v1527
    %v1559 = vunpack.c.l.b16 %v1555
    %v1560 = vunpack.c.l.b16 %v1556
    %v1561 = vrot.slane %v1559, 1
    %v1562 = vsel %vm240, %v1560, %v1561
    %v1563 = vpack.c.b16 %v1562, %v1562
    %1564 = vrot.lane.b32.xlu0 %v1563, 80
    %v1565 = vpop.permute.xlu0 %1564
    %v1567 = vsel %vm121, %v1565, 0
    %1569 = vmatprep.subr.bf16.mxu0 0
    %1570 = vmatpush1.bf16.msra.mxu0 %v119
    %1571 = vmatprep.subr.bf16.mxu0 0
    %1572 = vmatpush1.bf16.msra.mxu0 0
    %1573 = vmatprep.subr.bf16.mxu0 0
    %1574 = vmatpush1.bf16.msra.mxu0 0
    %1575 = vmatprep.subr.bf16.mxu0 0
    %1576 = vmatpush1.bf16.msra.mxu0 0
    %1577 = vmatprep.subr.bf16.mxu0 0
    %1578 = vmatpush1.bf16.msra.mxu0 0
    %1579 = vmatprep.subr.bf16.mxu0 0
    %1580 = vmatpush1.bf16.msra.mxu0 0
    %1581 = vmatprep.subr.bf16.mxu0 0
    %1582 = vmatpush1.bf16.msra.mxu0 0
    %1583 = vmatprep.subr.bf16.mxu0 0
    %1584 = vmatpush1.bf16.msra.mxu0 0
    %1585 = vmatprep.subr.bf16.mxu0 0
    %1586 = vmatpush1.bf16.msra.mxu0 0
    %1587 = vmatprep.subr.bf16.mxu0 0
    %1588 = vmatpush1.bf16.msra.mxu0 0
    %1589 = vmatprep.subr.bf16.mxu0 0
    %1590 = vmatpush1.bf16.msra.mxu0 0
    %1591 = vmatprep.subr.bf16.mxu0 0
    %1592 = vmatpush1.bf16.msra.mxu0 0
    %1593 = vmatprep.subr.bf16.mxu0 0
    %1594 = vmatpush1.bf16.msra.mxu0 0
    %1595 = vmatprep.subr.bf16.mxu0 0
    %1596 = vmatpush1.bf16.msra.mxu0 0
    %1597 = vmatprep.subr.bf16.mxu0 0
    %1598 = vmatpush1.bf16.msra.mxu0 0
    %1599 = vmatprep.subr.bf16.mxu0 0
    %1600 = vmatpush1.bf16.msra.mxu0 0
    %1601 = vmatprep.mubr.bf16.mxu0 0
    %1602 = vmatmul.mubr.bf16.gmra.mrb[0].mxu0 %v1567
    %v1603 = vpop.f32.mrb[0].mxu0
    %v1604 = vadd.f32 0.0, %v1603
    %v1605 = vpop.f32.mrb[0].mxu0
    %v1606 = vpop.f32.mrb[0].mxu0
    %v1607 = vpop.f32.mrb[0].mxu0
    %1608 = vdwg.mxu0
    %v1610 = vrot.slane %v1604, 6
    %v1611 = vrot.slane %v1604, 7
    %v1614 = vadd.f32 %v102, %v1610
    %v1615 = vadd.f32 %v110, %v1611
    %v1616 = vxor.u32 %v1614, 2147483648
    %v1617 = vxor.u32 %v1615, 2147483648
    %v1618 = vmul.f32 %v1616, 1.442695
    %v1619 = vpow.pop %v1618
    %v1620 = vmul.f32 %v1617, 1.442695
    %v1621 = vpow.pop %v1620
    %v1622 = vadd.f32 %v1619, 1.0
    %v1623 = vadd.f32 %v1621, 1.0
    %v1624 = vrcp.pop %v1622
    %v1625 = vmul.f32 1.0, %v1624
    %v1626 = vrcp.pop %v1623
    %v1627 = vmul.f32 1.0, %v1626
    %v1628 = vtanh.pop %v1614
    %v1629 = vtanh.pop %v1615
    %v1632 = vrot.slane %v1514, 7
    %v1633 = vrot.slane %v1515, 7
    %v1636 = vmul.f32 %v1625, %v1632
    %v1637 = vmul.f32 %v1627, %v1633
    %1640 = vrot.lane.b32.xlu0 %v1628, 96
    %v1641 = vpop.permute.xlu0 %1640
    %1642 = vrot.lane.b32.xlu0 %v1629, 96
    %v1643 = vpop.permute.xlu0 %1642
    %v1646 = vmul.f32 %v1625, %v1641
    %v1647 = vmul.f32 %v1627, %v1643
    %1650 = vrot.lane.b32.xlu0 %v1646, 16
    %v1651 = vpop.permute.xlu0 %1650
    %1652 = vrot.lane.b32.xlu0 %v1647, 16
    %v1653 = vpop.permute.xlu0 %1652
    %v1656 = vadd.f32 %v1636, %v1651
    %v1657 = vadd.f32 %v1637, %v1653
    %v1658 = vtanh.pop %v1656
    %v1659 = vtanh.pop %v1657
    %1662 = vrot.lane.b32.xlu0 %v1658, 32
    %v1663 = vpop.permute.xlu0 %1662
    %1664 = vrot.lane.b32.xlu0 %v1659, 32
    %v1665 = vpop.permute.xlu0 %1664
    %v1668 = vmul.f32 %v1625, %v1663
    %v1669 = vmul.f32 %v1627, %v1665
    %v1673 = vunpack.c.l.s4 1983009808
    %v1674 = vunpack.c.0.s8 %v1673
    %v1675 = vlaneseq
    %v1676 = vshrl.u32 %v1675, 7
    %v1677 = vsub.s32 %v1674, %v1676
    %v1678 = vrot.slane %v1668, %v1677
    %v1679 = vcombine.high %v1678, %v1678
    %v1681 = vunpack.c.l.s4 1983009808
    %v1682 = vunpack.c.0.s8 %v1681
    %v1683 = vlaneseq
    %v1684 = vshrl.u32 %v1683, 7
    %v1685 = vsub.s32 %v1682, %v1684
    %v1686 = vrot.slane %v1669, %v1685
    %v1687 = vcombine.high %v1686, %v1686
    %v1688 = vsel %vm235, %v1679, %v1679
    %v1689 = vsel %vm237, %v1679, %v1688
    %v1690 = vrot.slane %v1687, 7
    %v1691 = vsel %vm240, %v1690, %v1689
    %v1692 = vsel %vm242, %v1690, %v1691
    %v1693 = vsel %vm244, %v1690, %v1692
    %v1694 = vsel %vm246, %v1690, %v1693
    %1695 = vrot.lane.b32.xlu0 %v1694, 112
    %v1696 = vpop.permute.xlu0 %1695
    %1698 = vst.msk [vmem:[#allocation2 + $0x2] sm:$0x3] %vm538, %v1696
    %v1699 = vpack.c.bf16 %v1668, %v1668
    %v1700 = vpack.c.bf16 %v1669, %v1669
    %v1703 = vunpack.c.l.b16 %v1699
    %v1704 = vunpack.c.l.b16 %v1700
    %v1705 = vrot.slane %v1703, 2
    %v1706 = vrot.slane %v1704, 1
    %v1707 = vsel %vm240, %v1706, %v1705
    %v1708 = vpack.c.b16 %v1707, %v1707
    %1709 = vrot.lane.b32.xlu0 %v1708, 80
    %v1710 = vpop.permute.xlu0 %1709
    %v1712 = vsel %vm121, %v1710, 0
    %1714 = vmatprep.subr.bf16.mxu0 0
    %1715 = vmatpush1.bf16.msra.mxu0 %v119
    %1716 = vmatprep.subr.bf16.mxu0 0
    %1717 = vmatpush1.bf16.msra.mxu0 0
    %1718 = vmatprep.subr.bf16.mxu0 0
    %1719 = vmatpush1.bf16.msra.mxu0 0
    %1720 = vmatprep.subr.bf16.mxu0 0
    %1721 = vmatpush1.bf16.msra.mxu0 0
    %1722 = vmatprep.subr.bf16.mxu0 0
    %1723 = vmatpush1.bf16.msra.mxu0 0
    %1724 = vmatprep.subr.bf16.mxu0 0
    %1725 = vmatpush1.bf16.msra.mxu0 0
    %1726 = vmatprep.subr.bf16.mxu0 0
    %1727 = vmatpush1.bf16.msra.mxu0 0
    %1728 = vmatprep.subr.bf16.mxu0 0
    %1729 = vmatpush1.bf16.msra.mxu0 0
    %1730 = vmatprep.subr.bf16.mxu0 0
    %1731 = vmatpush1.bf16.msra.mxu0 0
    %1732 = vmatprep.subr.bf16.mxu0 0
    %1733 = vmatpush1.bf16.msra.mxu0 0
    %1734 = vmatprep.subr.bf16.mxu0 0
    %1735 = vmatpush1.bf16.msra.mxu0 0
    %1736 = vmatprep.subr.bf16.mxu0 0
    %1737 = vmatpush1.bf16.msra.mxu0 0
    %1738 = vmatprep.subr.bf16.mxu0 0
    %1739 = vmatpush1.bf16.msra.mxu0 0
    %1740 = vmatprep.subr.bf16.mxu0 0
    %1741 = vmatpush1.bf16.msra.mxu0 0
    %1742 = vmatprep.subr.bf16.mxu0 0
    %1743 = vmatpush1.bf16.msra.mxu0 0
    %1744 = vmatprep.subr.bf16.mxu0 0
    %1745 = vmatpush1.bf16.msra.mxu0 0
    %1746 = vmatprep.mubr.bf16.mxu0 0
    %1747 = vmatmul.mubr.bf16.gmra.mrb[0].mxu0 %v1712
    %v1748 = vpop.f32.mrb[0].mxu0
    %v1749 = vadd.f32 0.0, %v1748
    %v1750 = vpop.f32.mrb[0].mxu0
    %v1751 = vpop.f32.mrb[0].mxu0
    %v1752 = vpop.f32.mrb[0].mxu0
    %1753 = vdwg.mxu0
    %v1755 = vrot.slane %v1749, 5
    %v1756 = vrot.slane %v1749, 6
    %v1759 = vadd.f32 %v102, %v1755
    %v1760 = vadd.f32 %v110, %v1756
    %v1761 = vxor.u32 %v1759, 2147483648
    %v1762 = vxor.u32 %v1760, 2147483648
    %v1763 = vmul.f32 %v1761, 1.442695
    %v1764 = vpow.pop %v1763
    %v1765 = vmul.f32 %v1762, 1.442695
    %v1766 = vpow.pop %v1765
    %v1767 = vadd.f32 %v1764, 1.0
    %v1768 = vadd.f32 %v1766, 1.0
    %v1769 = vrcp.pop %v1767
    %v1770 = vmul.f32 1.0, %v1769
    %v1771 = vrcp.pop %v1768
    %v1772 = vmul.f32 1.0, %v1771
    %v1773 = vtanh.pop %v1759
    %v1774 = vtanh.pop %v1760
    %v1777 = vrot.slane %v1656, 7
    %v1778 = vrot.slane %v1657, 7
    %v1781 = vmul.f32 %v1770, %v1777
    %v1782 = vmul.f32 %v1772, %v1778
    %1785 = vrot.lane.b32.xlu0 %v1773, 96
    %v1786 = vpop.permute.xlu0 %1785
    %1787 = vrot.lane.b32.xlu0 %v1774, 96
    %v1788 = vpop.permute.xlu0 %1787
    %v1791 = vmul.f32 %v1770, %v1786
    %v1792 = vmul.f32 %v1772, %v1788
    %1795 = vrot.lane.b32.xlu0 %v1791, 16
    %v1796 = vpop.permute.xlu0 %1795
    %1797 = vrot.lane.b32.xlu0 %v1792, 16
    %v1798 = vpop.permute.xlu0 %1797
    %v1801 = vadd.f32 %v1781, %v1796
    %v1802 = vadd.f32 %v1782, %v1798
    %v1803 = vtanh.pop %v1801
    %v1804 = vtanh.pop %v1802
    %1807 = vrot.lane.b32.xlu0 %v1803, 32
    %v1808 = vpop.permute.xlu0 %1807
    %1809 = vrot.lane.b32.xlu0 %v1804, 32
    %v1810 = vpop.permute.xlu0 %1809
    %v1813 = vmul.f32 %v1770, %v1808
    %v1814 = vmul.f32 %v1772, %v1810
    %v1818 = vunpack.c.l.s4 1983009808
    %v1819 = vunpack.c.0.s8 %v1818
    %v1820 = vlaneseq
    %v1821 = vshrl.u32 %v1820, 7
    %v1822 = vsub.s32 %v1819, %v1821
    %v1823 = vrot.slane %v1813, %v1822
    %v1824 = vcombine.high %v1823, %v1823
    %v1826 = vunpack.c.l.s4 1983009808
    %v1827 = vunpack.c.0.s8 %v1826
    %v1828 = vlaneseq
    %v1829 = vshrl.u32 %v1828, 7
    %v1830 = vsub.s32 %v1827, %v1829
    %v1831 = vrot.slane %v1814, %v1830
    %v1832 = vcombine.high %v1831, %v1831
    %v1833 = vrot.slane %v1824, 1
    %v1834 = vsel %vm235, %v1833, %v1833
    %v1835 = vsel %vm237, %v1833, %v1834
    %v1836 = vsel %vm240, %v1832, %v1835
    %v1837 = vsel %vm242, %v1832, %v1836
    %v1838 = vsel %vm244, %v1832, %v1837
    %v1839 = vsel %vm246, %v1832, %v1838
    %1841 = vst.msk [vmem:[#allocation2 + $0x2] sm:$0x3] %vm682, %v1839
    %v1842 = vpack.c.bf16 %v1813, %v1813
    %v1843 = vpack.c.bf16 %v1814, %v1814
    %v1846 = vunpack.c.l.b16 %v1842
    %v1847 = vunpack.c.l.b16 %v1843
    %v1848 = vrot.slane %v1846, 3
    %v1849 = vrot.slane %v1847, 2
    %v1850 = vsel %vm240, %v1849, %v1848
    %v1851 = vpack.c.b16 %v1850, %v1850
    %1852 = vrot.lane.b32.xlu0 %v1851, 80
    %v1853 = vpop.permute.xlu0 %1852
    %v1855 = vsel %vm121, %v1853, 0
    %1857 = vmatprep.subr.bf16.mxu0 0
    %1858 = vmatpush1.bf16.msra.mxu0 %v119
    %1859 = vmatprep.subr.bf16.mxu0 0
    %1860 = vmatpush1.bf16.msra.mxu0 0
    %1861 = vmatprep.subr.bf16.mxu0 0
    %1862 = vmatpush1.bf16.msra.mxu0 0
    %1863 = vmatprep.subr.bf16.mxu0 0
    %1864 = vmatpush1.bf16.msra.mxu0 0
    %1865 = vmatprep.subr.bf16.mxu0 0
    %1866 = vmatpush1.bf16.msra.mxu0 0
    %1867 = vmatprep.subr.bf16.mxu0 0
    %1868 = vmatpush1.bf16.msra.mxu0 0
    %1869 = vmatprep.subr.bf16.mxu0 0
    %1870 = vmatpush1.bf16.msra.mxu0 0
    %1871 = vmatprep.subr.bf16.mxu0 0
    %1872 = vmatpush1.bf16.msra.mxu0 0
    %1873 = vmatprep.subr.bf16.mxu0 0
    %1874 = vmatpush1.bf16.msra.mxu0 0
    %1875 = vmatprep.subr.bf16.mxu0 0
    %1876 = vmatpush1.bf16.msra.mxu0 0
    %1877 = vmatprep.subr.bf16.mxu0 0
    %1878 = vmatpush1.bf16.msra.mxu0 0
    %1879 = vmatprep.subr.bf16.mxu0 0
    %1880 = vmatpush1.bf16.msra.mxu0 0
    %1881 = vmatprep.subr.bf16.mxu0 0
    %1882 = vmatpush1.bf16.msra.mxu0 0
    %1883 = vmatprep.subr.bf16.mxu0 0
    %1884 = vmatpush1.bf16.msra.mxu0 0
    %1885 = vmatprep.subr.bf16.mxu0 0
    %1886 = vmatpush1.bf16.msra.mxu0 0
    %1887 = vmatprep.subr.bf16.mxu0 0
    %1888 = vmatpush1.bf16.msra.mxu0 0
    %1889 = vmatprep.mubr.bf16.mxu0 0
    %1890 = vmatmul.mubr.bf16.gmra.mrb[0].mxu0 %v1855
    %v1891 = vpop.f32.mrb[0].mxu0
    %v1892 = vadd.f32 0.0, %v1891
    %v1893 = vpop.f32.mrb[0].mxu0
    %v1894 = vpop.f32.mrb[0].mxu0
    %v1895 = vpop.f32.mrb[0].mxu0
    %1896 = vdwg.mxu0
    %v1898 = vrot.slane %v1892, 4
    %v1899 = vrot.slane %v1892, 5
    %v1902 = vadd.f32 %v102, %v1898
    %v1903 = vadd.f32 %v110, %v1899
    %v1904 = vxor.u32 %v1902, 2147483648
    %v1905 = vxor.u32 %v1903, 2147483648
    %v1906 = vmul.f32 %v1904, 1.442695
    %v1907 = vpow.pop %v1906
    %v1908 = vmul.f32 %v1905, 1.442695
    %v1909 = vpow.pop %v1908
    %v1910 = vadd.f32 %v1907, 1.0
    %v1911 = vadd.f32 %v1909, 1.0
    %v1912 = vrcp.pop %v1910
    %v1913 = vmul.f32 1.0, %v1912
    %v1914 = vrcp.pop %v1911
    %v1915 = vmul.f32 1.0, %v1914
    %v1916 = vtanh.pop %v1902
    %v1917 = vtanh.pop %v1903
    %v1920 = vrot.slane %v1801, 7
    %v1921 = vrot.slane %v1802, 7
    %v1924 = vmul.f32 %v1913, %v1920
    %v1925 = vmul.f32 %v1915, %v1921
    %1928 = vrot.lane.b32.xlu0 %v1916, 96
    %v1929 = vpop.permute.xlu0 %1928
    %1930 = vrot.lane.b32.xlu0 %v1917, 96
    %v1931 = vpop.permute.xlu0 %1930
    %v1934 = vmul.f32 %v1913, %v1929
    %v1935 = vmul.f32 %v1915, %v1931
    %1938 = vrot.lane.b32.xlu0 %v1934, 16
    %v1939 = vpop.permute.xlu0 %1938
    %1940 = vrot.lane.b32.xlu0 %v1935, 16
    %v1941 = vpop.permute.xlu0 %1940
    %v1944 = vadd.f32 %v1924, %v1939
    %v1945 = vadd.f32 %v1925, %v1941
    %v1946 = vtanh.pop %v1944
    %v1947 = vtanh.pop %v1945
    %1950 = vrot.lane.b32.xlu0 %v1946, 32
    %v1951 = vpop.permute.xlu0 %1950
    %1952 = vrot.lane.b32.xlu0 %v1947, 32
    %v1953 = vpop.permute.xlu0 %1952
    %v1956 = vmul.f32 %v1913, %v1951
    %v1957 = vmul.f32 %v1915, %v1953
    %v1960 = vcombine.high %v1956, %v1956
    %v1962 = vunpack.c.l.s4 1983009808
    %v1963 = vunpack.c.0.s8 %v1962
    %v1964 = vlaneseq
    %v1965 = vshrl.u32 %v1964, 7
    %v1966 = vsub.s32 %v1963, %v1965
    %v1967 = vrot.slane %v1960, %v1966
    %v1968 = vcombine.high %v1957, %v1957
    %v1970 = vunpack.c.l.s4 1983009808
    %v1971 = vunpack.c.0.s8 %v1970
    %v1972 = vlaneseq
    %v1973 = vshrl.u32 %v1972, 7
    %v1974 = vsub.s32 %v1971, %v1973
    %v1975 = vrot.slane %v1968, %v1974
    %v1976 = vsel %vm235, %v1967, %v1967
    %v1977 = vsel %vm237, %v1967, %v1976
    %v1978 = vrot.slane %v1975, 7
    %v1979 = vsel %vm240, %v1978, %v1977
    %v1980 = vsel %vm242, %v1978, %v1979
    %v1981 = vsel %vm244, %v1978, %v1980
    %v1982 = vsel %vm246, %v1978, %v1981
    %1983 = vrot.lane.b32.xlu0 %v1982, 16
    %v1984 = vpop.permute.xlu0 %1983
    %1986 = vst.msk [vmem:[#allocation2 + $0x2] sm:$0x3] %vm828, %v1984
    %v1987 = vpack.c.bf16 %v1956, %v1956
    %v1988 = vpack.c.bf16 %v1957, %v1957
    %v1991 = vunpack.c.l.b16 %v1987
    %v1992 = vunpack.c.l.b16 %v1988
    %v1993 = vrot.slane %v1991, 4
    %v1994 = vrot.slane %v1992, 3
    %v1995 = vsel %vm240, %v1994, %v1993
    %v1996 = vpack.c.b16 %v1995, %v1995
    %1997 = vrot.lane.b32.xlu0 %v1996, 80
    %v1998 = vpop.permute.xlu0 %1997
    %v2000 = vsel %vm121, %v1998, 0
    %2002 = vmatprep.subr.bf16.mxu0 0
    %2003 = vmatpush1.bf16.msra.mxu0 %v119
    %2004 = vmatprep.subr.bf16.mxu0 0
    %2005 = vmatpush1.bf16.msra.mxu0 0
    %2006 = vmatprep.subr.bf16.mxu0 0
    %2007 = vmatpush1.bf16.msra.mxu0 0
    %2008 = vmatprep.subr.bf16.mxu0 0
    %2009 = vmatpush1.bf16.msra.mxu0 0
    %2010 = vmatprep.subr.bf16.mxu0 0
    %2011 = vmatpush1.bf16.msra.mxu0 0
    %2012 = vmatprep.subr.bf16.mxu0 0
    %2013 = vmatpush1.bf16.msra.mxu0 0
    %2014 = vmatprep.subr.bf16.mxu0 0
    %2015 = vmatpush1.bf16.msra.mxu0 0
    %2016 = vmatprep.subr.bf16.mxu0 0
    %2017 = vmatpush1.bf16.msra.mxu0 0
    %2018 = vmatprep.subr.bf16.mxu0 0
    %2019 = vmatpush1.bf16.msra.mxu0 0
    %2020 = vmatprep.subr.bf16.mxu0 0
    %2021 = vmatpush1.bf16.msra.mxu0 0
    %2022 = vmatprep.subr.bf16.mxu0 0
    %2023 = vmatpush1.bf16.msra.mxu0 0
    %2024 = vmatprep.subr.bf16.mxu0 0
    %2025 = vmatpush1.bf16.msra.mxu0 0
    %2026 = vmatprep.subr.bf16.mxu0 0
    %2027 = vmatpush1.bf16.msra.mxu0 0
    %2028 = vmatprep.subr.bf16.mxu0 0
    %2029 = vmatpush1.bf16.msra.mxu0 0
    %2030 = vmatprep.subr.bf16.mxu0 0
    %2031 = vmatpush1.bf16.msra.mxu0 0
    %2032 = vmatprep.subr.bf16.mxu0 0
    %2033 = vmatpush1.bf16.msra.mxu0 0
    %2034 = vmatprep.mubr.bf16.mxu0 0
    %2035 = vmatmul.mubr.bf16.gmra.mrb[0].mxu0 %v2000
    %v2036 = vpop.f32.mrb[0].mxu0
    %v2037 = vadd.f32 0.0, %v2036
    %v2038 = vpop.f32.mrb[0].mxu0
    %v2039 = vpop.f32.mrb[0].mxu0
    %v2040 = vpop.f32.mrb[0].mxu0
    %2041 = vdwg.mxu0
    %v2043 = vrot.slane %v2037, 3
    %v2044 = vrot.slane %v2037, 4
    %v2047 = vadd.f32 %v102, %v2043
    %v2048 = vadd.f32 %v110, %v2044
    %v2049 = vxor.u32 %v2047, 2147483648
    %v2050 = vxor.u32 %v2048, 2147483648
    %v2051 = vmul.f32 %v2049, 1.442695
    %v2052 = vpow.pop %v2051
    %v2053 = vmul.f32 %v2050, 1.442695
    %v2054 = vpow.pop %v2053
    %v2055 = vadd.f32 %v2052, 1.0
    %v2056 = vadd.f32 %v2054, 1.0
    %v2057 = vrcp.pop %v2055
    %v2058 = vmul.f32 1.0, %v2057
    %v2059 = vrcp.pop %v2056
    %v2060 = vmul.f32 1.0, %v2059
    %v2061 = vtanh.pop %v2047
    %v2062 = vtanh.pop %v2048
    %v2065 = vrot.slane %v1944, 7
    %v2066 = vrot.slane %v1945, 7
    %v2069 = vmul.f32 %v2058, %v2065
    %v2070 = vmul.f32 %v2060, %v2066
    %2073 = vrot.lane.b32.xlu0 %v2061, 96
    %v2074 = vpop.permute.xlu0 %2073
    %2075 = vrot.lane.b32.xlu0 %v2062, 96
    %v2076 = vpop.permute.xlu0 %2075
    %v2079 = vmul.f32 %v2058, %v2074
    %v2080 = vmul.f32 %v2060, %v2076
    %2083 = vrot.lane.b32.xlu0 %v2079, 16
    %v2084 = vpop.permute.xlu0 %2083
    %2085 = vrot.lane.b32.xlu0 %v2080, 16
    %v2086 = vpop.permute.xlu0 %2085
    %v2089 = vadd.f32 %v2069, %v2084
    %v2090 = vadd.f32 %v2070, %v2086
    %v2091 = vtanh.pop %v2089
    %v2092 = vtanh.pop %v2090
    %2095 = vrot.lane.b32.xlu0 %v2091, 32
    %v2096 = vpop.permute.xlu0 %2095
    %2097 = vrot.lane.b32.xlu0 %v2092, 32
    %v2098 = vpop.permute.xlu0 %2097
    %v2101 = vmul.f32 %v2058, %v2096
    %v2102 = vmul.f32 %v2060, %v2098
    %v2105 = vcombine.high %v2101, %v2101
    %v2107 = vunpack.c.l.s4 1983009808
    %v2108 = vunpack.c.0.s8 %v2107
    %v2109 = vlaneseq
    %v2110 = vshrl.u32 %v2109, 7
    %v2111 = vsub.s32 %v2108, %v2110
    %v2112 = vrot.slane %v2105, %v2111
    %v2113 = vcombine.high %v2102, %v2102
    %v2115 = vunpack.c.l.s4 1983009808
    %v2116 = vunpack.c.0.s8 %v2115
    %v2117 = vlaneseq
    %v2118 = vshrl.u32 %v2117, 7
    %v2119 = vsub.s32 %v2116, %v2118
    %v2120 = vrot.slane %v2113, %v2119
    %v2121 = vrot.slane %v2112, 1
    %v2122 = vsel %vm235, %v2121, %v2121
    %v2123 = vsel %vm237, %v2121, %v2122
    %v2124 = vsel %vm240, %v2120, %v2123
    %v2125 = vsel %vm242, %v2120, %v2124
    %v2126 = vsel %vm244, %v2120, %v2125
    %v2127 = vsel %vm246, %v2120, %v2126
    %2128 = vrot.lane.b32.xlu0 %v2127, 32
    %v2129 = vpop.permute.xlu0 %2128
    %2131 = vst.msk [vmem:[#allocation2 + $0x2] sm:$0x3] %vm974, %v2129
    %v2132 = vpack.c.bf16 %v2101, %v2101
    %v2133 = vpack.c.bf16 %v2102, %v2102
    %v2136 = vunpack.c.l.b16 %v2132
    %v2137 = vunpack.c.l.b16 %v2133
    %v2138 = vrot.slane %v2136, 5
    %v2139 = vrot.slane %v2137, 4
    %v2140 = vsel %vm240, %v2139, %v2138
    %v2141 = vpack.c.b16 %v2140, %v2140
    %2142 = vrot.lane.b32.xlu0 %v2141, 80
    %v2143 = vpop.permute.xlu0 %2142
    %v2145 = vsel %vm121, %v2143, 0
    %2147 = vmatprep.subr.bf16.mxu0 0
    %2148 = vmatpush1.bf16.msra.mxu0 %v119
    %2149 = vmatprep.subr.bf16.mxu0 0
    %2150 = vmatpush1.bf16.msra.mxu0 0
    %2151 = vmatprep.subr.bf16.mxu0 0
    %2152 = vmatpush1.bf16.msra.mxu0 0
    %2153 = vmatprep.subr.bf16.mxu0 0
    %2154 = vmatpush1.bf16.msra.mxu0 0
    %2155 = vmatprep.subr.bf16.mxu0 0
    %2156 = vmatpush1.bf16.msra.mxu0 0
    %2157 = vmatprep.subr.bf16.mxu0 0
    %2158 = vmatpush1.bf16.msra.mxu0 0
    %2159 = vmatprep.subr.bf16.mxu0 0
    %2160 = vmatpush1.bf16.msra.mxu0 0
    %2161 = vmatprep.subr.bf16.mxu0 0
    %2162 = vmatpush1.bf16.msra.mxu0 0
    %2163 = vmatprep.subr.bf16.mxu0 0
    %2164 = vmatpush1.bf16.msra.mxu0 0
    %2165 = vmatprep.subr.bf16.mxu0 0
    %2166 = vmatpush1.bf16.msra.mxu0 0
    %2167 = vmatprep.subr.bf16.mxu0 0
    %2168 = vmatpush1.bf16.msra.mxu0 0
    %2169 = vmatprep.subr.bf16.mxu0 0
    %2170 = vmatpush1.bf16.msra.mxu0 0
    %2171 = vmatprep.subr.bf16.mxu0 0
    %2172 = vmatpush1.bf16.msra.mxu0 0
    %2173 = vmatprep.subr.bf16.mxu0 0
    %2174 = vmatpush1.bf16.msra.mxu0 0
    %2175 = vmatprep.subr.bf16.mxu0 0
    %2176 = vmatpush1.bf16.msra.mxu0 0
    %2177 = vmatprep.subr.bf16.mxu0 0
    %2178 = vmatpush1.bf16.msra.mxu0 0
    %2179 = vmatprep.mubr.bf16.mxu0 0
    %2180 = vmatmul.mubr.bf16.gmra.mrb[0].mxu0 %v2145
    %v2181 = vpop.f32.mrb[0].mxu0
    %v2182 = vadd.f32 0.0, %v2181
    %v2183 = vpop.f32.mrb[0].mxu0
    %v2184 = vpop.f32.mrb[0].mxu0
    %v2185 = vpop.f32.mrb[0].mxu0
    %2186 = vdwg.mxu0
    %v2188 = vrot.slane %v2182, 2
    %v2189 = vrot.slane %v2182, 3
    %v2192 = vadd.f32 %v102, %v2188
    %v2193 = vadd.f32 %v110, %v2189
    %v2194 = vxor.u32 %v2192, 2147483648
    %v2195 = vxor.u32 %v2193, 2147483648
    %v2196 = vmul.f32 %v2194, 1.442695
    %v2197 = vpow.pop %v2196
    %v2198 = vmul.f32 %v2195, 1.442695
    %v2199 = vpow.pop %v2198
    %v2200 = vadd.f32 %v2197, 1.0
    %v2201 = vadd.f32 %v2199, 1.0
    %v2202 = vrcp.pop %v2200
    %v2203 = vmul.f32 1.0, %v2202
    %v2204 = vrcp.pop %v2201
    %v2205 = vmul.f32 1.0, %v2204
    %v2206 = vtanh.pop %v2192
    %v2207 = vtanh.pop %v2193
    %v2210 = vrot.slane %v2089, 7
    %v2211 = vrot.slane %v2090, 7
    %v2214 = vmul.f32 %v2203, %v2210
    %v2215 = vmul.f32 %v2205, %v2211
    %2218 = vrot.lane.b32.xlu0 %v2206, 96
    %v2219 = vpop.permute.xlu0 %2218
    %2220 = vrot.lane.b32.xlu0 %v2207, 96
    %v2221 = vpop.permute.xlu0 %2220
    %v2224 = vmul.f32 %v2203, %v2219
    %v2225 = vmul.f32 %v2205, %v2221
    %2228 = vrot.lane.b32.xlu0 %v2224, 16
    %v2229 = vpop.permute.xlu0 %2228
    %2230 = vrot.lane.b32.xlu0 %v2225, 16
    %v2231 = vpop.permute.xlu0 %2230
    %v2234 = vadd.f32 %v2214, %v2229
    %v2235 = vadd.f32 %v2215, %v2231
    %v2236 = vtanh.pop %v2234
    %v2237 = vtanh.pop %v2235
    %2240 = vrot.lane.b32.xlu0 %v2236, 32
    %v2241 = vpop.permute.xlu0 %2240
    %2242 = vrot.lane.b32.xlu0 %v2237, 32
    %v2243 = vpop.permute.xlu0 %2242
    %v2246 = vmul.f32 %v2203, %v2241
    %v2247 = vmul.f32 %v2205, %v2243
    %v2250 = vcombine.high %v2246, %v2246
    %v2252 = vunpack.c.l.s4 1983009808
    %v2253 = vunpack.c.0.s8 %v2252
    %v2254 = vlaneseq
    %v2255 = vshrl.u32 %v2254, 7
    %v2256 = vsub.s32 %v2253, %v2255
    %v2257 = vrot.slane %v2250, %v2256
    %v2258 = vcombine.high %v2257, %v2257
    %v2259 = vcombine.high %v2247, %v2247
    %v2261 = vunpack.c.l.s4 1983009808
    %v2262 = vunpack.c.0.s8 %v2261
    %v2263 = vlaneseq
    %v2264 = vshrl.u32 %v2263, 7
    %v2265 = vsub.s32 %v2262, %v2264
    %v2266 = vrot.slane %v2259, %v2265
    %v2267 = vcombine.high %v2266, %v2266
    %v2268 = vsel %vm235, %v2258, %v2258
    %v2269 = vsel %vm237, %v2258, %v2268
    %v2270 = vrot.slane %v2267, 7
    %v2271 = vsel %vm240, %v2270, %v2269
    %v2272 = vsel %vm242, %v2270, %v2271
    %v2273 = vsel %vm244, %v2270, %v2272
    %v2274 = vsel %vm246, %v2270, %v2273
    %2275 = vrot.lane.b32.xlu0 %v2274, 48
    %v2276 = vpop.permute.xlu0 %2275
    %2278 = vst.msk [vmem:[#allocation2 + $0x2] sm:$0x3] %vm1122, %v2276
    %v2279 = vpack.c.bf16 %v2246, %v2246
    %v2280 = vpack.c.bf16 %v2247, %v2247
    %v2283 = vunpack.c.l.b16 %v2279
    %v2284 = vunpack.c.l.b16 %v2280
    %v2285 = vrot.slane %v2283, 6
    %v2286 = vrot.slane %v2284, 5
    %v2287 = vsel %vm240, %v2286, %v2285
    %v2288 = vpack.c.b16 %v2287, %v2287
    %2289 = vrot.lane.b32.xlu0 %v2288, 80
    %v2290 = vpop.permute.xlu0 %2289
    %v2292 = vsel %vm121, %v2290, 0
    %2294 = vmatprep.subr.bf16.mxu0 0
    %2295 = vmatpush1.bf16.msra.mxu0 %v119
    %2296 = vmatprep.subr.bf16.mxu0 0
    %2297 = vmatpush1.bf16.msra.mxu0 0
    %2298 = vmatprep.subr.bf16.mxu0 0
    %2299 = vmatpush1.bf16.msra.mxu0 0
    %2300 = vmatprep.subr.bf16.mxu0 0
    %2301 = vmatpush1.bf16.msra.mxu0 0
    %2302 = vmatprep.subr.bf16.mxu0 0
    %2303 = vmatpush1.bf16.msra.mxu0 0
    %2304 = vmatprep.subr.bf16.mxu0 0
    %2305 = vmatpush1.bf16.msra.mxu0 0
    %2306 = vmatprep.subr.bf16.mxu0 0
    %2307 = vmatpush1.bf16.msra.mxu0 0
    %2308 = vmatprep.subr.bf16.mxu0 0
    %2309 = vmatpush1.bf16.msra.mxu0 0
    %2310 = vmatprep.subr.bf16.mxu0 0
    %2311 = vmatpush1.bf16.msra.mxu0 0
    %2312 = vmatprep.subr.bf16.mxu0 0
    %2313 = vmatpush1.bf16.msra.mxu0 0
    %2314 = vmatprep.subr.bf16.mxu0 0
    %2315 = vmatpush1.bf16.msra.mxu0 0
    %2316 = vmatprep.subr.bf16.mxu0 0
    %2317 = vmatpush1.bf16.msra.mxu0 0
    %2318 = vmatprep.subr.bf16.mxu0 0
    %2319 = vmatpush1.bf16.msra.mxu0 0
    %2320 = vmatprep.subr.bf16.mxu0 0
    %2321 = vmatpush1.bf16.msra.mxu0 0
    %2322 = vmatprep.subr.bf16.mxu0 0
    %2323 = vmatpush1.bf16.msra.mxu0 0
    %2324 = vmatprep.subr.bf16.mxu0 0
    %2325 = vmatpush1.bf16.msra.mxu0 0
    %2326 = vmatprep.mubr.bf16.mxu0 0
    %2327 = vmatmul.mubr.bf16.gmra.mrb[0].mxu0 %v2292
    %v2328 = vpop.f32.mrb[0].mxu0
    %v2329 = vadd.f32 0.0, %v2328
    %v2330 = vpop.f32.mrb[0].mxu0
    %v2331 = vpop.f32.mrb[0].mxu0
    %v2332 = vpop.f32.mrb[0].mxu0
    %2333 = vdwg.mxu0
    %v2335 = vrot.slane %v2329, 1
    %v2336 = vrot.slane %v2329, 2
    %v2339 = vadd.f32 %v102, %v2335
    %v2340 = vadd.f32 %v110, %v2336
    %v2341 = vxor.u32 %v2339, 2147483648
    %v2342 = vxor.u32 %v2340, 2147483648
    %v2343 = vmul.f32 %v2341, 1.442695
    %v2344 = vpow.pop %v2343
    %v2345 = vmul.f32 %v2342, 1.442695
    %v2346 = vpow.pop %v2345
    %v2347 = vadd.f32 %v2344, 1.0
    %v2348 = vadd.f32 %v2346, 1.0
    %v2349 = vrcp.pop %v2347
    %v2350 = vmul.f32 1.0, %v2349
    %v2351 = vrcp.pop %v2348
    %v2352 = vmul.f32 1.0, %v2351
    %v2353 = vtanh.pop %v2339
    %v2354 = vtanh.pop %v2340
    %v2357 = vrot.slane %v2234, 7
    %v2358 = vrot.slane %v2235, 7
    %v2361 = vmul.f32 %v2350, %v2357
    %v2362 = vmul.f32 %v2352, %v2358
    %2365 = vrot.lane.b32.xlu0 %v2353, 96
    %v2366 = vpop.permute.xlu0 %2365
    %2367 = vrot.lane.b32.xlu0 %v2354, 96
    %v2368 = vpop.permute.xlu0 %2367
    %v2371 = vmul.f32 %v2350, %v2366
    %v2372 = vmul.f32 %v2352, %v2368
    %2375 = vrot.lane.b32.xlu0 %v2371, 16
    %v2376 = vpop.permute.xlu0 %2375
    %2377 = vrot.lane.b32.xlu0 %v2372, 16
    %v2378 = vpop.permute.xlu0 %2377
    %v2381 = vadd.f32 %v2361, %v2376
    %v2382 = vadd.f32 %v2362, %v2378
    %v2383 = vtanh.pop %v2381
    %v2384 = vtanh.pop %v2382
    %2387 = vrot.lane.b32.xlu0 %v2383, 32
    %v2388 = vpop.permute.xlu0 %2387
    %2389 = vrot.lane.b32.xlu0 %v2384, 32
    %v2390 = vpop.permute.xlu0 %2389
    %v2393 = vmul.f32 %v2350, %v2388
    %v2394 = vmul.f32 %v2352, %v2390
    %v2397 = vcombine.high %v2393, %v2393
    %v2399 = vunpack.c.l.s4 1983009808
    %v2400 = vunpack.c.0.s8 %v2399
    %v2401 = vlaneseq
    %v2402 = vshrl.u32 %v2401, 7
    %v2403 = vsub.s32 %v2400, %v2402
    %v2404 = vrot.slane %v2397, %v2403
    %v2405 = vcombine.high %v2404, %v2404
    %v2406 = vcombine.high %v2394, %v2394
    %v2408 = vunpack.c.l.s4 1983009808
    %v2409 = vunpack.c.0.s8 %v2408
    %v2410 = vlaneseq
    %v2411 = vshrl.u32 %v2410, 7
    %v2412 = vsub.s32 %v2409, %v2411
    %v2413 = vrot.slane %v2406, %v2412
    %v2414 = vcombine.high %v2413, %v2413
    %v2415 = vrot.slane %v2405, 1
    %v2416 = vsel %vm235, %v2415, %v2415
    %v2417 = vsel %vm237, %v2415, %v2416
    %v2418 = vsel %vm240, %v2414, %v2417
    %v2419 = vsel %vm242, %v2414, %v2418
    %v2420 = vsel %vm244, %v2414, %v2419
    %v2421 = vsel %vm246, %v2414, %v2420
    %2422 = vrot.lane.b32.xlu0 %v2421, 64
    %v2423 = vpop.permute.xlu0 %2422
    %2425 = vst.msk [vmem:[#allocation2 + $0x2] sm:$0x3] %vm1270, %v2423
    %v2426 = vld [vmem:[#allocation2] sm:$0xf]
    %v2429 = vunpack.c.l.s4 1983009808
    %v2430 = vunpack.c.0.s8 %v2429
    %v2431 = vlaneseq
    %v2432 = vshrl.u32 %v2431, 7
    %v2433 = vsub.s32 %v2430, %v2432
    %v2434 = vrot.slane %v2426, %v2433
    %v2435 = vcombine.high %v2434, %v2434
    %v2438 = vpack.c.bf16 %v2434, %v2434
    %v2439 = vpack.c.bf16 %v2435, %v2435
    %v2440 = vld [vmem:[#allocation3] sm:$0xf]
    %v2441 = vld [vmem:[#allocation3 + $0x4] sm:$0xf]
    %v2442 = vld [vmem:[#allocation3 + $0x8] sm:$0xf]
    %v2443 = vld [vmem:[#allocation3 + $0xc] sm:$0xf]
    %v2444 = vld [vmem:[#allocation3 + $0x10] sm:$0xf]
    %v2445 = vld [vmem:[#allocation3 + $0x14] sm:$0xf]
    %v2446 = vld [vmem:[#allocation3 + $0x18] sm:$0xf]
    %v2447 = vld [vmem:[#allocation3 + $0x1c] sm:$0xf]
    %v2448 = vld [vmem:[#allocation3 + $0x20] sm:$0xf]
    %v2449 = vld [vmem:[#allocation3 + $0x24] sm:$0xf]
    %v2450 = vld [vmem:[#allocation3 + $0x28] sm:$0xf]
    %v2451 = vld [vmem:[#allocation3 + $0x2c] sm:$0xf]
    %v2452 = vld [vmem:[#allocation3 + $0x30] sm:$0xf]
    %v2453 = vld [vmem:[#allocation3 + $0x34] sm:$0xf]
    %v2454 = vld [vmem:[#allocation3 + $0x38] sm:$0xf]
    %v2455 = vld [vmem:[#allocation3 + $0x3c] sm:$0xf]
    %v2456 = vld [vmem:[#allocation3 + $0x40] sm:$0xf]
    %v2457 = vld [vmem:[#allocation3 + $0x44] sm:$0xf]
    %v2458 = vld [vmem:[#allocation3 + $0x48] sm:$0xf]
    %v2459 = vld [vmem:[#allocation3 + $0x4c] sm:$0xf]
    %v2460 = vld [vmem:[#allocation3 + $0x50] sm:$0xf]
    %v2461 = vld [vmem:[#allocation3 + $0x54] sm:$0xf]
    %v2462 = vld [vmem:[#allocation3 + $0x58] sm:$0xf]
    %v2463 = vld [vmem:[#allocation3 + $0x5c] sm:$0xf]
    %v2464 = vld [vmem:[#allocation3 + $0x60] sm:$0xf]
    %v2465 = vld [vmem:[#allocation3 + $0x64] sm:$0xf]
    %v2466 = vld [vmem:[#allocation3 + $0x68] sm:$0xf]
    %v2467 = vld [vmem:[#allocation3 + $0x6c] sm:$0xf]
    %v2468 = vld [vmem:[#allocation3 + $0x70] sm:$0xf]
    %v2469 = vld [vmem:[#allocation3 + $0x74] sm:$0xf]
    %v2470 = vld [vmem:[#allocation3 + $0x78] sm:$0xf]
    %v2471 = vld [vmem:[#allocation3 + $0x7c] sm:$0xf]
    %v2472 = vld [vmem:[%s5] sm:$0x1]
    %v2474 = vlaneseq
    %v2475 = vshrl.u32 %v2474, 7
    %v2476 = vsub.s32 0, %v2475
    %v2477 = vrot.slane %v2472, %v2476
    %v2511 = vunpack.c.l.b16 %v2440
    %v2512 = vunpack.c.l.b16 %v2441
    %v2513 = vunpack.c.l.b16 %v2442
    %v2514 = vunpack.c.l.b16 %v2443
    %v2515 = vunpack.c.l.b16 %v2444
    %v2516 = vunpack.c.l.b16 %v2445
    %v2517 = vunpack.c.l.b16 %v2446
    %v2518 = vunpack.c.l.b16 %v2447
    %v2519 = vunpack.c.l.b16 %v2448
    %v2520 = vunpack.c.l.b16 %v2449
    %v2521 = vunpack.c.l.b16 %v2450
    %v2522 = vunpack.c.l.b16 %v2451
    %v2523 = vunpack.c.l.b16 %v2452
    %v2524 = vunpack.c.l.b16 %v2453
    %v2525 = vunpack.c.l.b16 %v2454
    %v2526 = vunpack.c.l.b16 %v2455
    %v2527 = vunpack.c.l.b16 %v2456
    %v2528 = vunpack.c.l.b16 %v2457
    %v2529 = vunpack.c.l.b16 %v2458
    %v2530 = vunpack.c.l.b16 %v2459
    %v2531 = vunpack.c.l.b16 %v2460
    %v2532 = vunpack.c.l.b16 %v2461
    %v2533 = vunpack.c.l.b16 %v2462
    %v2534 = vunpack.c.l.b16 %v2463
    %v2535 = vunpack.c.l.b16 %v2464
    %v2536 = vunpack.c.l.b16 %v2465
    %v2537 = vunpack.c.l.b16 %v2466
    %v2538 = vunpack.c.l.b16 %v2467
    %v2539 = vunpack.c.l.b16 %v2468
    %v2540 = vunpack.c.l.b16 %v2469
    %v2541 = vunpack.c.l.b16 %v2470
    %v2542 = vunpack.c.l.b16 %v2471
    %v2543 = vpack.c.b16 %v2512, %v2511
    %v2544 = vpack.c.b16 %v2514, %v2513
    %v2545 = vpack.c.b16 %v2516, %v2515
    %v2546 = vpack.c.b16 %v2518, %v2517
    %v2547 = vpack.c.b16 %v2520, %v2519
    %v2548 = vpack.c.b16 %v2522, %v2521
    %v2549 = vpack.c.b16 %v2524, %v2523
    %v2550 = vpack.c.b16 %v2526, %v2525
    %v2551 = vpack.c.b16 %v2528, %v2527
    %v2552 = vpack.c.b16 %v2530, %v2529
    %v2553 = vpack.c.b16 %v2532, %v2531
    %v2554 = vpack.c.b16 %v2534, %v2533
    %v2555 = vpack.c.b16 %v2536, %v2535
    %v2556 = vpack.c.b16 %v2538, %v2537
    %v2557 = vpack.c.b16 %v2540, %v2539
    %v2558 = vpack.c.b16 %v2542, %v2541
    %2575 = vmatprep.subr.bf16.mxu0 0
    %2576 = vmatpush1.bf16.msra.mxu0 %v2543
    %2577 = vmatprep.subr.bf16.mxu0 0
    %2578 = vmatpush1.bf16.msra.mxu0 %v2544
    %2579 = vmatprep.subr.bf16.mxu0 0
    %2580 = vmatpush1.bf16.msra.mxu0 %v2545
    %2581 = vmatprep.subr.bf16.mxu0 0
    %2582 = vmatpush1.bf16.msra.mxu0 %v2546
    %2583 = vmatprep.subr.bf16.mxu0 0
    %2584 = vmatpush1.bf16.msra.mxu0 %v2547
    %2585 = vmatprep.subr.bf16.mxu0 0
    %2586 = vmatpush1.bf16.msra.mxu0 %v2548
    %2587 = vmatprep.subr.bf16.mxu0 0
    %2588 = vmatpush1.bf16.msra.mxu0 %v2549
    %2589 = vmatprep.subr.bf16.mxu0 0
    %2590 = vmatpush1.bf16.msra.mxu0 %v2550
    %2591 = vmatprep.subr.bf16.mxu0 0
    %2592 = vmatpush1.bf16.msra.mxu0 %v2551
    %2593 = vmatprep.subr.bf16.mxu0 0
    %2594 = vmatpush1.bf16.msra.mxu0 %v2552
    %2595 = vmatprep.subr.bf16.mxu0 0
    %2596 = vmatpush1.bf16.msra.mxu0 %v2553
    %2597 = vmatprep.subr.bf16.mxu0 0
    %2598 = vmatpush1.bf16.msra.mxu0 %v2554
    %2599 = vmatprep.subr.bf16.mxu0 0
    %2600 = vmatpush1.bf16.msra.mxu0 %v2555
    %2601 = vmatprep.subr.bf16.mxu0 0
    %2602 = vmatpush1.bf16.msra.mxu0 %v2556
    %2603 = vmatprep.subr.bf16.mxu0 0
    %2604 = vmatpush1.bf16.msra.mxu0 %v2557
    %2605 = vmatprep.subr.bf16.mxu0 0
    %2606 = vmatpush1.bf16.msra.mxu0 %v2558
    %2607 = vmatprep.mubr.bf16.mxu0 %v2439
    %2608 = vmatmul.mubr.bf16.gmra.mrb[0].mxu0 %v2438
    %v2609 = vpop.f32.mrb[0].mxu0
    %v2610 = vadd.f32 %v2477, %v2609
    %v2611 = vpop.f32.mrb[0].mxu0
    %v2612 = vpop.f32.mrb[0].mxu0
    %v2613 = vpop.f32.mrb[0].mxu0
    %2614 = vdwg.mxu0
    %2615 = vst [vmem:[#allocation6] sm:$0x3] %v2610
    // Predicated region
    $region30: #{rnn_model_forward.1} parent=1 // pred_check
      _
    $region31: #{rnn_model_forward.1} parent=1 // pred_check_branch
      %2617 = sbr.rel (0) target = $region33
    $region32: #{rnn_model_forward.1} parent=1 // pred_region
      %s2619 = ssub.s32 32, 32
      %2620 = vsyncadd [#allocation5], %s2619
      %s2622 = sshll.u32 [#allocation6], 4
      %s2623 = int_to_ptr.vmem [resolvable:$true] %s2622
      %2625 = dma.vmem_to_hbm [thread:$0]  %s2623, 32, %s6, [#allocation5]
    $region33: #{rnn_model_forward.1} parent=1 // pred_fallthru
      _
    // Predicated region
    $region34: #{rnn_model_forward.1} parent=1 // pred_check
      _
    $region35: #{rnn_model_forward.1} parent=1 // pred_check_branch
      %2627 = sbr.rel (0) target = $region37
    $region36: #{rnn_model_forward.1} parent=1 // pred_region
      %2628 = dma.done [#allocation5], 32
    $region37: #{rnn_model_forward.1} parent=1 // pred_fallthru
      _
    %2629 = vsyncpa [#allocation4], 1
    %2630 = vsyncpa [#allocation5], 1

</llo_original>
